<compile_context>
chip_gen: v7x
topology: tpu7x:2x2x1
jax: 0.10.0
libtpu: 0.0.40
codegen_flags: <defaults>
</compile_context>

<pallas_src>
import functools

import jax
import jax.numpy as jnp
from jax.experimental import pallas as pl
from jax.experimental.pallas import tpu as pltpu

EPS = 1e-6  # matches GeM.__init__(eps=1e-06)


def _int_pow(x, n):
    """x**n for a static positive int n, via exponentiation by squaring (VPU only)."""
    n = int(n)
    result = None
    base = x
    while n > 0:
        if n & 1:
            result = base if result is None else result * base
        n >>= 1
        if n:
            base = base * base
    return result


def gem_kernel(p_ref, x_ref, o_ref, acc_ref, *, inv_hw, static_p, hw, hw_chunk):
    # p_ref:   SMEM f32[1]        (learnable exponent, scalar-prefetched)
    # x_ref:   VMEM [TM, hw_chunk] input tile (row tile i, spatial chunk k)
    # o_ref:   VMEM [1, TM]        lane-dense output slab (resident across k)
    # acc_ref: VMEM [1, TM] f32    running spatial sum of x^p
    k = pl.program_id(1)

    @pl.when(k == 0)
    def _():
        acc_ref[...] = jnp.zeros_like(acc_ref)

    x = x_ref[...].astype(jnp.float32)
    x = jnp.maximum(x, EPS)  # clamp(min=eps)

    if static_p is not None:
        # Integer-p fast path: pure VPU multiplies, no per-element log/exp
        # (important on v5e where the single EUP has no bf16 and saturates first).
        xp = _int_pow(x, static_p)
    else:
        # Dynamic (learnable) p: x^p = exp(p * log(x)), valid since x >= eps > 0.
        # (If profiling shows this EUP-bound on v6e/v7x, the log/exp could run in bf16.)
        xp = jnp.exp(p_ref[0] * jnp.log(x))

    if hw % hw_chunk != 0:
        # Last spatial chunk is ragged: zero out-of-range columns so OOB garbage
        # never contributes to valid rows' sums.
        col = k * hw_chunk + jax.lax.broadcasted_iota(jnp.int32, xp.shape, 1)
        xp = jnp.where(col < hw, xp, 0.0)

    acc_ref[...] += jnp.sum(xp, axis=-1).reshape(1, -1)

    @pl.when(k == pl.num_programs(1) - 1)
    def _():
        m = acc_ref[...] * inv_hw                       # mean over H*W
        inv_p = (1.0 / float(static_p)) if static_p is not None else (1.0 / p_ref[0])
        o_ref[...] = jnp.exp(jnp.log(m) * inv_p).astype(o_ref.dtype)   # m^(1/p)


def _lane_pad(n):
    return ((n + 127) // 128) * 128


def _choose_tiles(n_rows, hw, itemsize, target_bytes):
    """Pick (TM, n_row_tiles, hw_chunk, n_hw, chunk_pad) for the 2-D grid."""
    hw_pad = _lane_pad(hw)

    # Spatial (lane) chunking: keep one 128-row slab of a chunk under budget.
    if 128 * hw_pad * itemsize <= target_bytes:
        hw_chunk = hw                     # single full-width chunk (block dim == array dim)
    else:
        hw_chunk = max(128, ((target_bytes // (128 * itemsize)) // 128) * 128)
    n_hw = pl.cdiv(hw, hw_chunk)
    chunk_pad = _lane_pad(min(hw_chunk, hw))   # what actually lands in VMEM / DMA

    # Row (sublane) tiling: biggest TM (multiple of 128) keeping the tile ~target.
    rows = max(1, target_bytes // (chunk_pad * itemsize))
    tm = max(128, min(2048, (rows // 128) * 128))
    tm = min(tm, _lane_pad(n_rows))            # don't over-fetch tiny problems

    # Keep >= 4 row tiles when R permits: megacore sharding (v7x) + DMA/compute overlap.
    desired_tiles = min(4, pl.cdiv(n_rows, 128))
    if desired_tiles > 1:
        tm = min(tm, max(128, ((n_rows // desired_tiles) // 128) * 128))

    n_row_tiles = pl.cdiv(n_rows, tm)
    return tm, n_row_tiles, hw_chunk, n_hw, chunk_pad


def gem_pool(x, p, *, static_p=None, target_tile_bytes=4 << 20):
    """x: (N, C, H, W) (f32 or bf16), p: (1,) float32 -> (N, C, 1, 1)."""
    N, C, H, W = x.shape
    R, HW = N * C, H * W
    x2 = x.reshape(R, HW)                      # pure reshape, no HBM copy
    itemsize = jnp.dtype(x.dtype).itemsize

    if static_p is not None:
        # static_p is an inference-time specialization; verify it matches p when
        # p is concrete (otherwise the caller guarantees frozen p == static_p).
        try:
            p_val = float(jnp.asarray(p).reshape(-1)[0])
        except Exception:
            p_val = None
        if p_val is not None and abs(p_val - float(static_p)) > 1e-6:
            raise ValueError(f"static_p={static_p} does not match p={p_val}")

    tm, n_row_tiles, hw_chunk, n_hw, chunk_pad = _choose_tiles(
        R, HW, itemsize, target_tile_bytes)

    # VMEM budget: double-buffered input tile + ~3x f32 intermediates (x, xp, sum)
    # + double-buffered output slab + accumulator, with headroom.
    in_tile = tm * chunk_pad * itemsize
    f32_tile = tm * chunk_pad * 4
    vmem_budget = 2 * in_tile + 3 * f32_tile + 2 * tm * itemsize + tm * 4
    vmem_limit = int(min(56 << 20, max(32 << 20, vmem_budget + (4 << 20))))

    kernel = functools.partial(
        gem_kernel, inv_hw=1.0 / float(HW), static_p=static_p,
        hw=HW, hw_chunk=hw_chunk)

    r_out = n_row_tiles * tm   # output stays lane-dense; extra columns sliced off
    out = pl.pallas_call(
        kernel,
        out_shape=jax.ShapeDtypeStruct((1, r_out), x.dtype),
        grid_spec=pltpu.PrefetchScalarGridSpec(
            num_scalar_prefetch=1,                      # p lands in SMEM
            grid=(n_row_tiles, n_hw),                   # rows parallel, HW reduce last
            in_specs=[pl.BlockSpec((tm, hw_chunk), lambda i, k, p_ref: (i, k))],
            out_specs=pl.BlockSpec((1, tm), lambda i, k, p_ref: (0, i)),
            scratch_shapes=[pltpu.VMEM((1, tm), jnp.float32)],
        ),
        compiler_params=pltpu.CompilerParams(
            dimension_semantics=("parallel", "arbitrary"),
            vmem_limit_bytes=vmem_limit,
        ),
    )(p.astype(jnp.float32), x2)

    return out.reshape(r_out)[:R].reshape(N, C, 1, 1)


def gem_reference(x, p):
    xp = jnp.maximum(x, EPS) ** p[0]
    m = jnp.mean(xp, axis=(2, 3), keepdims=True)
    return m ** (1.0 / p[0])


if __name__ == "__main__":
    key0, key1 = jax.random.split(jax.random.PRNGKey(0), 2)
    # Deterministic parameter init, as in GeM.__init__: p = ones(1) * 3.0
    p_param = jnp.ones((1,), dtype=jnp.float32) * 3.0

    x = jax.random.normal(key0, (2, 4, 16, 16), dtype=jnp.float32)
    ref = gem_reference(x, p_param)

    # Dynamic (learnable-p) path — faithful to the nn.Parameter semantics.
    out = jax.block_until_ready(gem_pool(x, p_param))
    assert out.shape == (2, 4, 1, 1)
    assert jnp.allclose(out, ref, rtol=1e-4, atol=1e-5)

    # Integer-p specialization (frozen-p inference): VPU pow, no per-element log/exp.
    out_static = jax.block_until_ready(gem_pool(x, p_param, static_p=3))
    assert jnp.allclose(out_static, ref, rtol=1e-4, atol=1e-5)

    # Exercise the chunked-HW reduction axis + ragged-chunk mask path
    # (14x14 = 196 spatial, forced 128-wide chunks via a tiny tile budget).
    x2 = jax.random.normal(key1, (2, 4, 14, 14), dtype=jnp.float32)
    ref2 = gem_reference(x2, p_param)
    out2 = jax.block_until_ready(gem_pool(x2, p_param, target_tile_bytes=64 * 1024))
    assert jnp.allclose(out2, ref2, rtol=1e-4, atol=1e-5)

    print("KERNEL_OK")
</pallas_src>

<mosaic_0001>
module attributes {stable_mosaic.version = 11 : i64} {
  func.func @gem_kernel(%arg0: i32, %arg1: i32, %arg2: memref<1xf32, #tpu.memory_space<smem>>, %arg3: memref<128x256xf32, #tpu.memory_space<vmem>>, %arg4: memref<1x128xf32, #tpu.memory_space<vmem>>, %arg5: memref<1x128xf32, #tpu.memory_space<vmem>>) attributes {dimension_semantics = [#tpu.dimension_semantics<parallel>, #tpu.dimension_semantics<arbitrary>], iteration_bounds = array<i64: 1, 1>, scalar_prefetch = 1 : i64, scratch_operands = 1 : i64, tpu.core_type = #tpu.core_type<tc>, window_params = [{transform_indices = @transform_0, window_bounds = array<i64: 128, 256>}, {transform_indices = @transform_1, window_bounds = array<i64: 1, 128>}]} {
    %c0_i32 = arith.constant 0 : i32
    %0 = arith.cmpi eq, %arg1, %c0_i32 : i32
    %1 = arith.extui %0 : i1 to i32
    %c0_i32_0 = arith.constant 0 : i32
    %2 = arith.cmpi ne, %1, %c0_i32_0 : i32
    scf.if %2 {
      %cst_10 = arith.constant 0.000000e+00 : f32
      %19 = vector.broadcast %cst_10 : f32 to vector<1x128xf32>
      %c0_11 = arith.constant 0 : index
      %c0_12 = arith.constant 0 : index
      %20 = vector.load %arg5[%c0_11, %c0_12] : memref<1x128xf32, #tpu.memory_space<vmem>>, vector<1x128xf32>
      tpu.vector_store %arg5[%c0_11, %c0_12], %19 {strides = array<i32>} : memref<1x128xf32, #tpu.memory_space<vmem>>, vector<1x128xf32>,
    } else {
    }
    %c0 = arith.constant 0 : index
    %c0_1 = arith.constant 0 : index
    %3 = vector.load %arg3[%c0, %c0_1] : memref<128x256xf32, #tpu.memory_space<vmem>>, vector<128x256xf32>
    %cst = arith.constant 9.99999997E-7 : f32
    %4 = vector.broadcast %cst : f32 to vector<128x256xf32>
    %5 = arith.maximumf %3, %4 : vector<128x256xf32>
    %c0_2 = arith.constant 0 : index
    %6 = memref.load %arg2[%c0_2] : memref<1xf32, #tpu.memory_space<smem>>
    %7 = math.log %5 : vector<128x256xf32>
    %8 = vector.broadcast %6 : f32 to vector<128x256xf32>
    %9 = arith.mulf %8, %7 : vector<128x256xf32>
    %10 = math.exp %9 : vector<128x256xf32>
    %c0_3 = arith.constant 0 : index
    %c0_4 = arith.constant 0 : index
    %11 = vector.load %arg5[%c0_3, %c0_4] : memref<1x128xf32, #tpu.memory_space<vmem>>, vector<1x128xf32>
    %cst_5 = arith.constant dense<0.000000e+00> : vector<128xf32>
    %12 = vector.multi_reduction <add>, %10, %cst_5 [1] : vector<128x256xf32> to vector<128xf32>
    %13 = vector.shape_cast %12 : vector<128xf32> to vector<1x128xf32>
    %14 = arith.addf %11, %13 : vector<1x128xf32>
    %c0_6 = arith.constant 0 : index
    %c0_7 = arith.constant 0 : index
    %15 = vector.load %arg5[%c0_6, %c0_7] : memref<1x128xf32, #tpu.memory_space<vmem>>, vector<1x128xf32>
    tpu.vector_store %arg5[%c0_6, %c0_7], %14 {strides = array<i32>} : memref<1x128xf32, #tpu.memory_space<vmem>>, vector<1x128xf32>,
    %c0_i32_8 = arith.constant 0 : i32
    %16 = arith.cmpi eq, %arg1, %c0_i32_8 : i32
    %17 = arith.extui %16 : i1 to i32
    %c0_i32_9 = arith.constant 0 : i32
    %18 = arith.cmpi ne, %17, %c0_i32_9 : i32
    scf.if %18 {
      %c0_10 = arith.constant 0 : index
      %c0_11 = arith.constant 0 : index
      %19 = vector.load %arg5[%c0_10, %c0_11] : memref<1x128xf32, #tpu.memory_space<vmem>>, vector<1x128xf32>
      %cst_12 = arith.constant 3.906250e-03 : f32
      %20 = vector.broadcast %cst_12 : f32 to vector<1x128xf32>
      %21 = arith.mulf %19, %20 : vector<1x128xf32>
      %c0_13 = arith.constant 0 : index
      %22 = memref.load %arg2[%c0_13] : memref<1xf32, #tpu.memory_space<smem>>
      %cst_14 = arith.constant 1.000000e+00 : f32
      %23 = arith.divf %cst_14, %22 : f32
      %24 = math.log %21 : vector<1x128xf32>
      %25 = vector.broadcast %23 : f32 to vector<1x128xf32>
      %26 = arith.mulf %24, %25 : vector<1x128xf32>
      %27 = math.exp %26 : vector<1x128xf32>
      %c0_15 = arith.constant 0 : index
      %c0_16 = arith.constant 0 : index
      %28 = vector.load %arg4[%c0_15, %c0_16] : memref<1x128xf32, #tpu.memory_space<vmem>>, vector<1x128xf32>
      tpu.vector_store %arg4[%c0_15, %c0_16], %27 {strides = array<i32>} : memref<1x128xf32, #tpu.memory_space<vmem>>, vector<1x128xf32>,
    } else {
    }
    return
  }
  func.func @transform_0(%arg0: i32, %arg1: i32, %arg2: memref<1xf32, #tpu.memory_space<smem>>) -> (i32, i32) {
    %c0_i32 = arith.constant 0 : i32
    return %arg0, %arg1 : i32, i32
  }
  func.func @transform_1(%arg0: i32, %arg1: i32, %arg2: memref<1xf32, #tpu.memory_space<smem>>) -> (i32, i32) {
    %c0_i32 = arith.constant 0 : i32
    %c0_i32_0 = arith.constant 0 : i32
    return %c0_i32, %arg0 : i32, i32
  }
}

</mosaic_0001>

<llo_original>
// kernel: tpu_custom_call.1
$region0: #{tpu_custom_call.1}
  #allocation0 [shape = 'u32[]', space=smem, size = 0x4, offset = 0x4, fixed_abs, tag = 'smem constant byte address 0x4 - core index']
  #allocation1 [shape = 'u32[144,128]{1,0:T(1,128)}', space=vmem, size = 0x12000, scoped, tag = 'internal scratch']
  #allocation2 [shape = 'f32[1,128]{1,0:T(1,128)}', space=vmem, size = 0x200, scoped, tag = 'scratch operand']
  #allocation3 [shape = 's32[1]{0}', space=sflag, size = 0x4, scoped, tag = 'scoped memory for tpu_custom_call.1']
  #allocation4 [shape = 'f32[1]{0:T(128)S(6)}', space=smem, size = 0x200, scoped, tag = 'prefetched SMEM operand 0']
  %s0 = inlined_call_operand.<no memory space> [shape: f32[1], index: 0, kind: input, shape index: {}]
  %s1 = inlined_call_operand.hbm [shape: f32[8,256], index: 1, kind: input, shape index: {}]
  %s2 = inlined_call_operand.hbm [shape: f32[1,128], index: 2, kind: output, shape index: {}]
  %s3 = sld [smem:[#allocation0]]
  $region26: #{tpu_custom_call.1} parent=0
    _
  %s5 = ssub.s32 1, %s3
  %s6 = scalar_select 0, %s5, %s3
  %7 = sst [smem:[#allocation4]] %s0
  $region1: #{tpu_custom_call.1} parent=0
    #allocation5 [shape = 'u8[131072]{0}', space=vmem, size = 0x20000, scoped, tag = 'input window, operand 1, single buffered']
    #allocation6 [shape = 's32[1]{0}', space=sflag, size = 0x4, scoped, tag = 'scoped memory for tpu_custom_call.1']
    #allocation7 [shape = 's32[1]{0}', space=sflag, size = 0x4, scoped, tag = 'scoped memory for tpu_custom_call.1']
    #allocation8 [shape = 'u8[512]{0}', space=vmem, size = 0x400, scoped, tag = 'output window, operand 0, single buffered']
    %8 = vsyncpa [#allocation6], 0
    %9 = vsyncpa [#allocation7], 0
    // Predicated region
    $region2: #{tpu_custom_call.1} parent=1 // pred_check
      _
    $region3: #{tpu_custom_call.1} parent=1 // pred_check_branch
      %11 = sbr.rel (0) target = $region5
    $region4: #{tpu_custom_call.1} parent=1 // pred_region
      %s13 = ssub.s32 4096, 256
      %14 = vsyncadd [#allocation6], %s13
      %s15 = sshll.u32 [#allocation5], 4
      %s16 = int_to_ptr.vmem [resolvable:$true] %s15
      %21 = dma.hbm_to_vmem [thread:$0]  %s1, 256, %s16, [#allocation6], 256, 256, 16
    $region5: #{tpu_custom_call.1} parent=1 // pred_fallthru
      _
    // Predicated region
    $region6: #{tpu_custom_call.1} parent=1 // pred_check
      _
    $region7: #{tpu_custom_call.1} parent=1 // pred_check_branch
      %23 = sbr.rel (0) target = $region9
    $region8: #{tpu_custom_call.1} parent=1 // pred_region
      %24 = dma.done [#allocation6], 4096
    $region9: #{tpu_custom_call.1} parent=1 // pred_fallthru
      _
    %p25 = scmp.eq.s32.totalorder 0, 0
    // Predicated region
    $region10: #{tpu_custom_call.1} parent=1 // pred_check
      %p26 = pneg %p25
    $region11: #{tpu_custom_call.1} parent=1 // pred_check_branch
      %28 = sbr.rel (%p26) target = $region13
    $region12: #{tpu_custom_call.1} parent=1 // pred_region
      %29 = vst [vmem:[#allocation2] sm:$0x1] 0.0
    $region13: #{tpu_custom_call.1} parent=1 // pred_fallthru
      _
    %v30 = vld [vmem:[#allocation5] sm:$0xff]
    %v31 = vld [vmem:[#allocation5 + $0x8] sm:$0xff]
    %v32 = vld [vmem:[#allocation5 + $0x10] sm:$0xff]
    %v33 = vld [vmem:[#allocation5 + $0x18] sm:$0xff]
    %v34 = vld [vmem:[#allocation5 + $0x20] sm:$0xff]
    %v35 = vld [vmem:[#allocation5 + $0x28] sm:$0xff]
    %v36 = vld [vmem:[#allocation5 + $0x30] sm:$0xff]
    %v37 = vld [vmem:[#allocation5 + $0x38] sm:$0xff]
    %v38 = vld [vmem:[#allocation5 + $0x40] sm:$0xff]
    %v39 = vld [vmem:[#allocation5 + $0x48] sm:$0xff]
    %v40 = vld [vmem:[#allocation5 + $0x50] sm:$0xff]
    %v41 = vld [vmem:[#allocation5 + $0x58] sm:$0xff]
    %v42 = vld [vmem:[#allocation5 + $0x60] sm:$0xff]
    %v43 = vld [vmem:[#allocation5 + $0x68] sm:$0xff]
    %v44 = vld [vmem:[#allocation5 + $0x70] sm:$0xff]
    %v45 = vld [vmem:[#allocation5 + $0x78] sm:$0xff]
    %v46 = vld [vmem:[#allocation5 + $0x80] sm:$0xff]
    %v47 = vld [vmem:[#allocation5 + $0x88] sm:$0xff]
    %v48 = vld [vmem:[#allocation5 + $0x90] sm:$0xff]
    %v49 = vld [vmem:[#allocation5 + $0x98] sm:$0xff]
    %v50 = vld [vmem:[#allocation5 + $0xa0] sm:$0xff]
    %v51 = vld [vmem:[#allocation5 + $0xa8] sm:$0xff]
    %v52 = vld [vmem:[#allocation5 + $0xb0] sm:$0xff]
    %v53 = vld [vmem:[#allocation5 + $0xb8] sm:$0xff]
    %v54 = vld [vmem:[#allocation5 + $0xc0] sm:$0xff]
    %v55 = vld [vmem:[#allocation5 + $0xc8] sm:$0xff]
    %v56 = vld [vmem:[#allocation5 + $0xd0] sm:$0xff]
    %v57 = vld [vmem:[#allocation5 + $0xd8] sm:$0xff]
    %v58 = vld [vmem:[#allocation5 + $0xe0] sm:$0xff]
    %v59 = vld [vmem:[#allocation5 + $0xe8] sm:$0xff]
    %v60 = vld [vmem:[#allocation5 + $0xf0] sm:$0xff]
    %v61 = vld [vmem:[#allocation5 + $0xf8] sm:$0xff]
    %v62 = vmax.f32 %v30, 1e-06
    %v63 = vmax.f32 %v31, 1e-06
    %v64 = vmax.f32 %v32, 1e-06
    %v65 = vmax.f32 %v33, 1e-06
    %v66 = vmax.f32 %v34, 1e-06
    %v67 = vmax.f32 %v35, 1e-06
    %v68 = vmax.f32 %v36, 1e-06
    %v69 = vmax.f32 %v37, 1e-06
    %v70 = vmax.f32 %v38, 1e-06
    %v71 = vmax.f32 %v39, 1e-06
    %v72 = vmax.f32 %v40, 1e-06
    %v73 = vmax.f32 %v41, 1e-06
    %v74 = vmax.f32 %v42, 1e-06
    %v75 = vmax.f32 %v43, 1e-06
    %v76 = vmax.f32 %v44, 1e-06
    %v77 = vmax.f32 %v45, 1e-06
    %v78 = vmax.f32 %v46, 1e-06
    %v79 = vmax.f32 %v47, 1e-06
    %v80 = vmax.f32 %v48, 1e-06
    %v81 = vmax.f32 %v49, 1e-06
    %v82 = vmax.f32 %v50, 1e-06
    %v83 = vmax.f32 %v51, 1e-06
    %v84 = vmax.f32 %v52, 1e-06
    %v85 = vmax.f32 %v53, 1e-06
    %v86 = vmax.f32 %v54, 1e-06
    %v87 = vmax.f32 %v55, 1e-06
    %v88 = vmax.f32 %v56, 1e-06
    %v89 = vmax.f32 %v57, 1e-06
    %v90 = vmax.f32 %v58, 1e-06
    %v91 = vmax.f32 %v59, 1e-06
    %v92 = vmax.f32 %v60, 1e-06
    %v93 = vmax.f32 %v61, 1e-06
    %s94 = sld [smem:[#allocation4]]
    %v95 = vlog2.pop %v62
    %v96 = vmul.f32 %v95, 0.6931472
    %v97 = vlog2.pop %v63
    %v98 = vmul.f32 %v97, 0.6931472
    %v99 = vlog2.pop %v64
    %v100 = vmul.f32 %v99, 0.6931472
    %v101 = vlog2.pop %v65
    %v102 = vmul.f32 %v101, 0.6931472
    %v103 = vlog2.pop %v66
    %v104 = vmul.f32 %v103, 0.6931472
    %v105 = vlog2.pop %v67
    %v106 = vmul.f32 %v105, 0.6931472
    %v107 = vlog2.pop %v68
    %v108 = vmul.f32 %v107, 0.6931472
    %v109 = vlog2.pop %v69
    %v110 = vmul.f32 %v109, 0.6931472
    %v111 = vlog2.pop %v70
    %v112 = vmul.f32 %v111, 0.6931472
    %v113 = vlog2.pop %v71
    %v114 = vmul.f32 %v113, 0.6931472
    %v115 = vlog2.pop %v72
    %v116 = vmul.f32 %v115, 0.6931472
    %v117 = vlog2.pop %v73
    %v118 = vmul.f32 %v117, 0.6931472
    %v119 = vlog2.pop %v74
    %v120 = vmul.f32 %v119, 0.6931472
    %v121 = vlog2.pop %v75
    %v122 = vmul.f32 %v121, 0.6931472
    %v123 = vlog2.pop %v76
    %v124 = vmul.f32 %v123, 0.6931472
    %v125 = vlog2.pop %v77
    %v126 = vmul.f32 %v125, 0.6931472
    %v127 = vlog2.pop %v78
    %v128 = vmul.f32 %v127, 0.6931472
    %v129 = vlog2.pop %v79
    %v130 = vmul.f32 %v129, 0.6931472
    %v131 = vlog2.pop %v80
    %v132 = vmul.f32 %v131, 0.6931472
    %v133 = vlog2.pop %v81
    %v134 = vmul.f32 %v133, 0.6931472
    %v135 = vlog2.pop %v82
    %v136 = vmul.f32 %v135, 0.6931472
    %v137 = vlog2.pop %v83
    %v138 = vmul.f32 %v137, 0.6931472
    %v139 = vlog2.pop %v84
    %v140 = vmul.f32 %v139, 0.6931472
    %v141 = vlog2.pop %v85
    %v142 = vmul.f32 %v141, 0.6931472
    %v143 = vlog2.pop %v86
    %v144 = vmul.f32 %v143, 0.6931472
    %v145 = vlog2.pop %v87
    %v146 = vmul.f32 %v145, 0.6931472
    %v147 = vlog2.pop %v88
    %v148 = vmul.f32 %v147, 0.6931472
    %v149 = vlog2.pop %v89
    %v150 = vmul.f32 %v149, 0.6931472
    %v151 = vlog2.pop %v90
    %v152 = vmul.f32 %v151, 0.6931472
    %v153 = vlog2.pop %v91
    %v154 = vmul.f32 %v153, 0.6931472
    %v155 = vlog2.pop %v92
    %v156 = vmul.f32 %v155, 0.6931472
    %v157 = vlog2.pop %v93
    %v158 = vmul.f32 %v157, 0.6931472
    %v159 = vstv %s94
    %v160 = vmul.f32 %v159, %v96
    %v161 = vmul.f32 %v159, %v98
    %v162 = vmul.f32 %v159, %v100
    %v163 = vmul.f32 %v159, %v102
    %v164 = vmul.f32 %v159, %v104
    %v165 = vmul.f32 %v159, %v106
    %v166 = vmul.f32 %v159, %v108
    %v167 = vmul.f32 %v159, %v110
    %v168 = vmul.f32 %v159, %v112
    %v169 = vmul.f32 %v159, %v114
    %v170 = vmul.f32 %v159, %v116
    %v171 = vmul.f32 %v159, %v118
    %v172 = vmul.f32 %v159, %v120
    %v173 = vmul.f32 %v159, %v122
    %v174 = vmul.f32 %v159, %v124
    %v175 = vmul.f32 %v159, %v126
    %v176 = vmul.f32 %v159, %v128
    %v177 = vmul.f32 %v159, %v130
    %v178 = vmul.f32 %v159, %v132
    %v179 = vmul.f32 %v159, %v134
    %v180 = vmul.f32 %v159, %v136
    %v181 = vmul.f32 %v159, %v138
    %v182 = vmul.f32 %v159, %v140
    %v183 = vmul.f32 %v159, %v142
    %v184 = vmul.f32 %v159, %v144
    %v185 = vmul.f32 %v159, %v146
    %v186 = vmul.f32 %v159, %v148
    %v187 = vmul.f32 %v159, %v150
    %v188 = vmul.f32 %v159, %v152
    %v189 = vmul.f32 %v159, %v154
    %v190 = vmul.f32 %v159, %v156
    %v191 = vmul.f32 %v159, %v158
    %v192 = vmul.f32 %v160, 1.442695
    %v193 = vpow.pop %v192
    %v194 = vmul.f32 %v161, 1.442695
    %v195 = vpow.pop %v194
    %v196 = vmul.f32 %v162, 1.442695
    %v197 = vpow.pop %v196
    %v198 = vmul.f32 %v163, 1.442695
    %v199 = vpow.pop %v198
    %v200 = vmul.f32 %v164, 1.442695
    %v201 = vpow.pop %v200
    %v202 = vmul.f32 %v165, 1.442695
    %v203 = vpow.pop %v202
    %v204 = vmul.f32 %v166, 1.442695
    %v205 = vpow.pop %v204
    %v206 = vmul.f32 %v167, 1.442695
    %v207 = vpow.pop %v206
    %v208 = vmul.f32 %v168, 1.442695
    %v209 = vpow.pop %v208
    %v210 = vmul.f32 %v169, 1.442695
    %v211 = vpow.pop %v210
    %v212 = vmul.f32 %v170, 1.442695
    %v213 = vpow.pop %v212
    %v214 = vmul.f32 %v171, 1.442695
    %v215 = vpow.pop %v214
    %v216 = vmul.f32 %v172, 1.442695
    %v217 = vpow.pop %v216
    %v218 = vmul.f32 %v173, 1.442695
    %v219 = vpow.pop %v218
    %v220 = vmul.f32 %v174, 1.442695
    %v221 = vpow.pop %v220
    %v222 = vmul.f32 %v175, 1.442695
    %v223 = vpow.pop %v222
    %v224 = vmul.f32 %v176, 1.442695
    %v225 = vpow.pop %v224
    %v226 = vmul.f32 %v177, 1.442695
    %v227 = vpow.pop %v226
    %v228 = vmul.f32 %v178, 1.442695
    %v229 = vpow.pop %v228
    %v230 = vmul.f32 %v179, 1.442695
    %v231 = vpow.pop %v230
    %v232 = vmul.f32 %v180, 1.442695
    %v233 = vpow.pop %v232
    %v234 = vmul.f32 %v181, 1.442695
    %v235 = vpow.pop %v234
    %v236 = vmul.f32 %v182, 1.442695
    %v237 = vpow.pop %v236
    %v238 = vmul.f32 %v183, 1.442695
    %v239 = vpow.pop %v238
    %v240 = vmul.f32 %v184, 1.442695
    %v241 = vpow.pop %v240
    %v242 = vmul.f32 %v185, 1.442695
    %v243 = vpow.pop %v242
    %v244 = vmul.f32 %v186, 1.442695
    %v245 = vpow.pop %v244
    %v246 = vmul.f32 %v187, 1.442695
    %v247 = vpow.pop %v246
    %v248 = vmul.f32 %v188, 1.442695
    %v249 = vpow.pop %v248
    %v250 = vmul.f32 %v189, 1.442695
    %v251 = vpow.pop %v250
    %v252 = vmul.f32 %v190, 1.442695
    %v253 = vpow.pop %v252
    %v254 = vmul.f32 %v191, 1.442695
    %v255 = vpow.pop %v254
    %v256 = vld [vmem:[#allocation2] sm:$0x1]
    %v257 = vadd.f32 %v193, %v195
    %258 = vadd.xlane.f32.xlu0 %v257
    %v259 = vpop.xlane.xlu0 %258
    %v260 = vadd.f32 %v197, %v199
    %261 = vadd.xlane.f32.xlu0 %v260
    %v262 = vpop.xlane.xlu0 %261
    %v263 = vadd.f32 %v201, %v203
    %264 = vadd.xlane.f32.xlu0 %v263
    %v265 = vpop.xlane.xlu0 %264
    %v266 = vadd.f32 %v205, %v207
    %267 = vadd.xlane.f32.xlu0 %v266
    %v268 = vpop.xlane.xlu0 %267
    %v269 = vadd.f32 %v209, %v211
    %270 = vadd.xlane.f32.xlu0 %v269
    %v271 = vpop.xlane.xlu0 %270
    %v272 = vadd.f32 %v213, %v215
    %273 = vadd.xlane.f32.xlu0 %v272
    %v274 = vpop.xlane.xlu0 %273
    %v275 = vadd.f32 %v217, %v219
    %276 = vadd.xlane.f32.xlu0 %v275
    %v277 = vpop.xlane.xlu0 %276
    %v278 = vadd.f32 %v221, %v223
    %279 = vadd.xlane.f32.xlu0 %v278
    %v280 = vpop.xlane.xlu0 %279
    %v281 = vadd.f32 %v225, %v227
    %282 = vadd.xlane.f32.xlu0 %v281
    %v283 = vpop.xlane.xlu0 %282
    %v284 = vadd.f32 %v229, %v231
    %285 = vadd.xlane.f32.xlu0 %v284
    %v286 = vpop.xlane.xlu0 %285
    %v287 = vadd.f32 %v233, %v235
    %288 = vadd.xlane.f32.xlu0 %v287
    %v289 = vpop.xlane.xlu0 %288
    %v290 = vadd.f32 %v237, %v239
    %291 = vadd.xlane.f32.xlu0 %v290
    %v292 = vpop.xlane.xlu0 %291
    %v293 = vadd.f32 %v241, %v243
    %294 = vadd.xlane.f32.xlu0 %v293
    %v295 = vpop.xlane.xlu0 %294
    %v296 = vadd.f32 %v245, %v247
    %297 = vadd.xlane.f32.xlu0 %v296
    %v298 = vpop.xlane.xlu0 %297
    %v299 = vadd.f32 %v249, %v251
    %300 = vadd.xlane.f32.xlu0 %v299
    %v301 = vpop.xlane.xlu0 %300
    %v302 = vadd.f32 %v253, %v255
    %303 = vadd.xlane.f32.xlu0 %v302
    %v304 = vpop.xlane.xlu0 %303
    %v321 = vlaneseq
    %v322 = vshrl.u32 %v321, 7
    %v323 = vsub.s32 0, %v322
    %v324 = vrot.slane %v259, %v323
    %v325 = vlaneseq
    %v326 = vshrl.u32 %v325, 7
    %v327 = vsub.s32 1, %v326
    %v328 = vrot.slane %v259, %v327
    %v329 = vlaneseq
    %v330 = vshrl.u32 %v329, 7
    %v331 = vsub.s32 2, %v330
    %v332 = vrot.slane %v259, %v331
    %v333 = vlaneseq
    %v334 = vshrl.u32 %v333, 7
    %v335 = vsub.s32 3, %v334
    %v336 = vrot.slane %v259, %v335
    %v337 = vlaneseq
    %v338 = vshrl.u32 %v337, 7
    %v339 = vsub.s32 4, %v338
    %v340 = vrot.slane %v259, %v339
    %v341 = vlaneseq
    %v342 = vshrl.u32 %v341, 7
    %v343 = vsub.s32 5, %v342
    %v344 = vrot.slane %v259, %v343
    %v345 = vlaneseq
    %v346 = vshrl.u32 %v345, 7
    %v347 = vsub.s32 6, %v346
    %v348 = vrot.slane %v259, %v347
    %v349 = vlaneseq
    %v350 = vshrl.u32 %v349, 7
    %v351 = vsub.s32 7, %v350
    %v352 = vrot.slane %v259, %v351
    %v353 = vlaneseq
    %v354 = vshrl.u32 %v353, 7
    %v355 = vsub.s32 0, %v354
    %v356 = vrot.slane %v262, %v355
    %v357 = vlaneseq
    %v358 = vshrl.u32 %v357, 7
    %v359 = vsub.s32 1, %v358
    %v360 = vrot.slane %v262, %v359
    %v361 = vlaneseq
    %v362 = vshrl.u32 %v361, 7
    %v363 = vsub.s32 2, %v362
    %v364 = vrot.slane %v262, %v363
    %v365 = vlaneseq
    %v366 = vshrl.u32 %v365, 7
    %v367 = vsub.s32 3, %v366
    %v368 = vrot.slane %v262, %v367
    %v369 = vlaneseq
    %v370 = vshrl.u32 %v369, 7
    %v371 = vsub.s32 4, %v370
    %v372 = vrot.slane %v262, %v371
    %v373 = vlaneseq
    %v374 = vshrl.u32 %v373, 7
    %v375 = vsub.s32 5, %v374
    %v376 = vrot.slane %v262, %v375
    %v377 = vlaneseq
    %v378 = vshrl.u32 %v377, 7
    %v379 = vsub.s32 6, %v378
    %v380 = vrot.slane %v262, %v379
    %v381 = vlaneseq
    %v382 = vshrl.u32 %v381, 7
    %v383 = vsub.s32 7, %v382
    %v384 = vrot.slane %v262, %v383
    %v385 = vlaneseq
    %v386 = vshrl.u32 %v385, 7
    %v387 = vsub.s32 0, %v386
    %v388 = vrot.slane %v265, %v387
    %v389 = vlaneseq
    %v390 = vshrl.u32 %v389, 7
    %v391 = vsub.s32 1, %v390
    %v392 = vrot.slane %v265, %v391
    %v393 = vlaneseq
    %v394 = vshrl.u32 %v393, 7
    %v395 = vsub.s32 2, %v394
    %v396 = vrot.slane %v265, %v395
    %v397 = vlaneseq
    %v398 = vshrl.u32 %v397, 7
    %v399 = vsub.s32 3, %v398
    %v400 = vrot.slane %v265, %v399
    %v401 = vlaneseq
    %v402 = vshrl.u32 %v401, 7
    %v403 = vsub.s32 4, %v402
    %v404 = vrot.slane %v265, %v403
    %v405 = vlaneseq
    %v406 = vshrl.u32 %v405, 7
    %v407 = vsub.s32 5, %v406
    %v408 = vrot.slane %v265, %v407
    %v409 = vlaneseq
    %v410 = vshrl.u32 %v409, 7
    %v411 = vsub.s32 6, %v410
    %v412 = vrot.slane %v265, %v411
    %v413 = vlaneseq
    %v414 = vshrl.u32 %v413, 7
    %v415 = vsub.s32 7, %v414
    %v416 = vrot.slane %v265, %v415
    %v417 = vlaneseq
    %v418 = vshrl.u32 %v417, 7
    %v419 = vsub.s32 0, %v418
    %v420 = vrot.slane %v268, %v419
    %v421 = vlaneseq
    %v422 = vshrl.u32 %v421, 7
    %v423 = vsub.s32 1, %v422
    %v424 = vrot.slane %v268, %v423
    %v425 = vlaneseq
    %v426 = vshrl.u32 %v425, 7
    %v427 = vsub.s32 2, %v426
    %v428 = vrot.slane %v268, %v427
    %v429 = vlaneseq
    %v430 = vshrl.u32 %v429, 7
    %v431 = vsub.s32 3, %v430
    %v432 = vrot.slane %v268, %v431
    %v433 = vlaneseq
    %v434 = vshrl.u32 %v433, 7
    %v435 = vsub.s32 4, %v434
    %v436 = vrot.slane %v268, %v435
    %v437 = vlaneseq
    %v438 = vshrl.u32 %v437, 7
    %v439 = vsub.s32 5, %v438
    %v440 = vrot.slane %v268, %v439
    %v441 = vlaneseq
    %v442 = vshrl.u32 %v441, 7
    %v443 = vsub.s32 6, %v442
    %v444 = vrot.slane %v268, %v443
    %v445 = vlaneseq
    %v446 = vshrl.u32 %v445, 7
    %v447 = vsub.s32 7, %v446
    %v448 = vrot.slane %v268, %v447
    %v449 = vlaneseq
    %v450 = vshrl.u32 %v449, 7
    %v451 = vsub.s32 0, %v450
    %v452 = vrot.slane %v271, %v451
    %v453 = vlaneseq
    %v454 = vshrl.u32 %v453, 7
    %v455 = vsub.s32 1, %v454
    %v456 = vrot.slane %v271, %v455
    %v457 = vlaneseq
    %v458 = vshrl.u32 %v457, 7
    %v459 = vsub.s32 2, %v458
    %v460 = vrot.slane %v271, %v459
    %v461 = vlaneseq
    %v462 = vshrl.u32 %v461, 7
    %v463 = vsub.s32 3, %v462
    %v464 = vrot.slane %v271, %v463
    %v465 = vlaneseq
    %v466 = vshrl.u32 %v465, 7
    %v467 = vsub.s32 4, %v466
    %v468 = vrot.slane %v271, %v467
    %v469 = vlaneseq
    %v470 = vshrl.u32 %v469, 7
    %v471 = vsub.s32 5, %v470
    %v472 = vrot.slane %v271, %v471
    %v473 = vlaneseq
    %v474 = vshrl.u32 %v473, 7
    %v475 = vsub.s32 6, %v474
    %v476 = vrot.slane %v271, %v475
    %v477 = vlaneseq
    %v478 = vshrl.u32 %v477, 7
    %v479 = vsub.s32 7, %v478
    %v480 = vrot.slane %v271, %v479
    %v481 = vlaneseq
    %v482 = vshrl.u32 %v481, 7
    %v483 = vsub.s32 0, %v482
    %v484 = vrot.slane %v274, %v483
    %v485 = vlaneseq
    %v486 = vshrl.u32 %v485, 7
    %v487 = vsub.s32 1, %v486
    %v488 = vrot.slane %v274, %v487
    %v489 = vlaneseq
    %v490 = vshrl.u32 %v489, 7
    %v491 = vsub.s32 2, %v490
    %v492 = vrot.slane %v274, %v491
    %v493 = vlaneseq
    %v494 = vshrl.u32 %v493, 7
    %v495 = vsub.s32 3, %v494
    %v496 = vrot.slane %v274, %v495
    %v497 = vlaneseq
    %v498 = vshrl.u32 %v497, 7
    %v499 = vsub.s32 4, %v498
    %v500 = vrot.slane %v274, %v499
    %v501 = vlaneseq
    %v502 = vshrl.u32 %v501, 7
    %v503 = vsub.s32 5, %v502
    %v504 = vrot.slane %v274, %v503
    %v505 = vlaneseq
    %v506 = vshrl.u32 %v505, 7
    %v507 = vsub.s32 6, %v506
    %v508 = vrot.slane %v274, %v507
    %v509 = vlaneseq
    %v510 = vshrl.u32 %v509, 7
    %v511 = vsub.s32 7, %v510
    %v512 = vrot.slane %v274, %v511
    %v513 = vlaneseq
    %v514 = vshrl.u32 %v513, 7
    %v515 = vsub.s32 0, %v514
    %v516 = vrot.slane %v277, %v515
    %v517 = vlaneseq
    %v518 = vshrl.u32 %v517, 7
    %v519 = vsub.s32 1, %v518
    %v520 = vrot.slane %v277, %v519
    %v521 = vlaneseq
    %v522 = vshrl.u32 %v521, 7
    %v523 = vsub.s32 2, %v522
    %v524 = vrot.slane %v277, %v523
    %v525 = vlaneseq
    %v526 = vshrl.u32 %v525, 7
    %v527 = vsub.s32 3, %v526
    %v528 = vrot.slane %v277, %v527
    %v529 = vlaneseq
    %v530 = vshrl.u32 %v529, 7
    %v531 = vsub.s32 4, %v530
    %v532 = vrot.slane %v277, %v531
    %v533 = vlaneseq
    %v534 = vshrl.u32 %v533, 7
    %v535 = vsub.s32 5, %v534
    %v536 = vrot.slane %v277, %v535
    %v537 = vlaneseq
    %v538 = vshrl.u32 %v537, 7
    %v539 = vsub.s32 6, %v538
    %v540 = vrot.slane %v277, %v539
    %v541 = vlaneseq
    %v542 = vshrl.u32 %v541, 7
    %v543 = vsub.s32 7, %v542
    %v544 = vrot.slane %v277, %v543
    %v545 = vlaneseq
    %v546 = vshrl.u32 %v545, 7
    %v547 = vsub.s32 0, %v546
    %v548 = vrot.slane %v280, %v547
    %v549 = vlaneseq
    %v550 = vshrl.u32 %v549, 7
    %v551 = vsub.s32 1, %v550
    %v552 = vrot.slane %v280, %v551
    %v553 = vlaneseq
    %v554 = vshrl.u32 %v553, 7
    %v555 = vsub.s32 2, %v554
    %v556 = vrot.slane %v280, %v555
    %v557 = vlaneseq
    %v558 = vshrl.u32 %v557, 7
    %v559 = vsub.s32 3, %v558
    %v560 = vrot.slane %v280, %v559
    %v561 = vlaneseq
    %v562 = vshrl.u32 %v561, 7
    %v563 = vsub.s32 4, %v562
    %v564 = vrot.slane %v280, %v563
    %v565 = vlaneseq
    %v566 = vshrl.u32 %v565, 7
    %v567 = vsub.s32 5, %v566
    %v568 = vrot.slane %v280, %v567
    %v569 = vlaneseq
    %v570 = vshrl.u32 %v569, 7
    %v571 = vsub.s32 6, %v570
    %v572 = vrot.slane %v280, %v571
    %v573 = vlaneseq
    %v574 = vshrl.u32 %v573, 7
    %v575 = vsub.s32 7, %v574
    %v576 = vrot.slane %v280, %v575
    %v577 = vlaneseq
    %v578 = vshrl.u32 %v577, 7
    %v579 = vsub.s32 0, %v578
    %v580 = vrot.slane %v283, %v579
    %v581 = vlaneseq
    %v582 = vshrl.u32 %v581, 7
    %v583 = vsub.s32 1, %v582
    %v584 = vrot.slane %v283, %v583
    %v585 = vlaneseq
    %v586 = vshrl.u32 %v585, 7
    %v587 = vsub.s32 2, %v586
    %v588 = vrot.slane %v283, %v587
    %v589 = vlaneseq
    %v590 = vshrl.u32 %v589, 7
    %v591 = vsub.s32 3, %v590
    %v592 = vrot.slane %v283, %v591
    %v593 = vlaneseq
    %v594 = vshrl.u32 %v593, 7
    %v595 = vsub.s32 4, %v594
    %v596 = vrot.slane %v283, %v595
    %v597 = vlaneseq
    %v598 = vshrl.u32 %v597, 7
    %v599 = vsub.s32 5, %v598
    %v600 = vrot.slane %v283, %v599
    %v601 = vlaneseq
    %v602 = vshrl.u32 %v601, 7
    %v603 = vsub.s32 6, %v602
    %v604 = vrot.slane %v283, %v603
    %v605 = vlaneseq
    %v606 = vshrl.u32 %v605, 7
    %v607 = vsub.s32 7, %v606
    %v608 = vrot.slane %v283, %v607
    %v609 = vlaneseq
    %v610 = vshrl.u32 %v609, 7
    %v611 = vsub.s32 0, %v610
    %v612 = vrot.slane %v286, %v611
    %v613 = vlaneseq
    %v614 = vshrl.u32 %v613, 7
    %v615 = vsub.s32 1, %v614
    %v616 = vrot.slane %v286, %v615
    %v617 = vlaneseq
    %v618 = vshrl.u32 %v617, 7
    %v619 = vsub.s32 2, %v618
    %v620 = vrot.slane %v286, %v619
    %v621 = vlaneseq
    %v622 = vshrl.u32 %v621, 7
    %v623 = vsub.s32 3, %v622
    %v624 = vrot.slane %v286, %v623
    %v625 = vlaneseq
    %v626 = vshrl.u32 %v625, 7
    %v627 = vsub.s32 4, %v626
    %v628 = vrot.slane %v286, %v627
    %v629 = vlaneseq
    %v630 = vshrl.u32 %v629, 7
    %v631 = vsub.s32 5, %v630
    %v632 = vrot.slane %v286, %v631
    %v633 = vlaneseq
    %v634 = vshrl.u32 %v633, 7
    %v635 = vsub.s32 6, %v634
    %v636 = vrot.slane %v286, %v635
    %v637 = vlaneseq
    %v638 = vshrl.u32 %v637, 7
    %v639 = vsub.s32 7, %v638
    %v640 = vrot.slane %v286, %v639
    %v641 = vlaneseq
    %v642 = vshrl.u32 %v641, 7
    %v643 = vsub.s32 0, %v642
    %v644 = vrot.slane %v289, %v643
    %v645 = vlaneseq
    %v646 = vshrl.u32 %v645, 7
    %v647 = vsub.s32 1, %v646
    %v648 = vrot.slane %v289, %v647
    %v649 = vlaneseq
    %v650 = vshrl.u32 %v649, 7
    %v651 = vsub.s32 2, %v650
    %v652 = vrot.slane %v289, %v651
    %v653 = vlaneseq
    %v654 = vshrl.u32 %v653, 7
    %v655 = vsub.s32 3, %v654
    %v656 = vrot.slane %v289, %v655
    %v657 = vlaneseq
    %v658 = vshrl.u32 %v657, 7
    %v659 = vsub.s32 4, %v658
    %v660 = vrot.slane %v289, %v659
    %v661 = vlaneseq
    %v662 = vshrl.u32 %v661, 7
    %v663 = vsub.s32 5, %v662
    %v664 = vrot.slane %v289, %v663
    %v665 = vlaneseq
    %v666 = vshrl.u32 %v665, 7
    %v667 = vsub.s32 6, %v666
    %v668 = vrot.slane %v289, %v667
    %v669 = vlaneseq
    %v670 = vshrl.u32 %v669, 7
    %v671 = vsub.s32 7, %v670
    %v672 = vrot.slane %v289, %v671
    %v673 = vlaneseq
    %v674 = vshrl.u32 %v673, 7
    %v675 = vsub.s32 0, %v674
    %v676 = vrot.slane %v292, %v675
    %v677 = vlaneseq
    %v678 = vshrl.u32 %v677, 7
    %v679 = vsub.s32 1, %v678
    %v680 = vrot.slane %v292, %v679
    %v681 = vlaneseq
    %v682 = vshrl.u32 %v681, 7
    %v683 = vsub.s32 2, %v682
    %v684 = vrot.slane %v292, %v683
    %v685 = vlaneseq
    %v686 = vshrl.u32 %v685, 7
    %v687 = vsub.s32 3, %v686
    %v688 = vrot.slane %v292, %v687
    %v689 = vlaneseq
    %v690 = vshrl.u32 %v689, 7
    %v691 = vsub.s32 4, %v690
    %v692 = vrot.slane %v292, %v691
    %v693 = vlaneseq
    %v694 = vshrl.u32 %v693, 7
    %v695 = vsub.s32 5, %v694
    %v696 = vrot.slane %v292, %v695
    %v697 = vlaneseq
    %v698 = vshrl.u32 %v697, 7
    %v699 = vsub.s32 6, %v698
    %v700 = vrot.slane %v292, %v699
    %v701 = vlaneseq
    %v702 = vshrl.u32 %v701, 7
    %v703 = vsub.s32 7, %v702
    %v704 = vrot.slane %v292, %v703
    %v705 = vlaneseq
    %v706 = vshrl.u32 %v705, 7
    %v707 = vsub.s32 0, %v706
    %v708 = vrot.slane %v295, %v707
    %v709 = vlaneseq
    %v710 = vshrl.u32 %v709, 7
    %v711 = vsub.s32 1, %v710
    %v712 = vrot.slane %v295, %v711
    %v713 = vlaneseq
    %v714 = vshrl.u32 %v713, 7
    %v715 = vsub.s32 2, %v714
    %v716 = vrot.slane %v295, %v715
    %v717 = vlaneseq
    %v718 = vshrl.u32 %v717, 7
    %v719 = vsub.s32 3, %v718
    %v720 = vrot.slane %v295, %v719
    %v721 = vlaneseq
    %v722 = vshrl.u32 %v721, 7
    %v723 = vsub.s32 4, %v722
    %v724 = vrot.slane %v295, %v723
    %v725 = vlaneseq
    %v726 = vshrl.u32 %v725, 7
    %v727 = vsub.s32 5, %v726
    %v728 = vrot.slane %v295, %v727
    %v729 = vlaneseq
    %v730 = vshrl.u32 %v729, 7
    %v731 = vsub.s32 6, %v730
    %v732 = vrot.slane %v295, %v731
    %v733 = vlaneseq
    %v734 = vshrl.u32 %v733, 7
    %v735 = vsub.s32 7, %v734
    %v736 = vrot.slane %v295, %v735
    %v737 = vlaneseq
    %v738 = vshrl.u32 %v737, 7
    %v739 = vsub.s32 0, %v738
    %v740 = vrot.slane %v298, %v739
    %v741 = vlaneseq
    %v742 = vshrl.u32 %v741, 7
    %v743 = vsub.s32 1, %v742
    %v744 = vrot.slane %v298, %v743
    %v745 = vlaneseq
    %v746 = vshrl.u32 %v745, 7
    %v747 = vsub.s32 2, %v746
    %v748 = vrot.slane %v298, %v747
    %v749 = vlaneseq
    %v750 = vshrl.u32 %v749, 7
    %v751 = vsub.s32 3, %v750
    %v752 = vrot.slane %v298, %v751
    %v753 = vlaneseq
    %v754 = vshrl.u32 %v753, 7
    %v755 = vsub.s32 4, %v754
    %v756 = vrot.slane %v298, %v755
    %v757 = vlaneseq
    %v758 = vshrl.u32 %v757, 7
    %v759 = vsub.s32 5, %v758
    %v760 = vrot.slane %v298, %v759
    %v761 = vlaneseq
    %v762 = vshrl.u32 %v761, 7
    %v763 = vsub.s32 6, %v762
    %v764 = vrot.slane %v298, %v763
    %v765 = vlaneseq
    %v766 = vshrl.u32 %v765, 7
    %v767 = vsub.s32 7, %v766
    %v768 = vrot.slane %v298, %v767
    %v769 = vlaneseq
    %v770 = vshrl.u32 %v769, 7
    %v771 = vsub.s32 0, %v770
    %v772 = vrot.slane %v301, %v771
    %v773 = vlaneseq
    %v774 = vshrl.u32 %v773, 7
    %v775 = vsub.s32 1, %v774
    %v776 = vrot.slane %v301, %v775
    %v777 = vlaneseq
    %v778 = vshrl.u32 %v777, 7
    %v779 = vsub.s32 2, %v778
    %v780 = vrot.slane %v301, %v779
    %v781 = vlaneseq
    %v782 = vshrl.u32 %v781, 7
    %v783 = vsub.s32 3, %v782
    %v784 = vrot.slane %v301, %v783
    %v785 = vlaneseq
    %v786 = vshrl.u32 %v785, 7
    %v787 = vsub.s32 4, %v786
    %v788 = vrot.slane %v301, %v787
    %v789 = vlaneseq
    %v790 = vshrl.u32 %v789, 7
    %v791 = vsub.s32 5, %v790
    %v792 = vrot.slane %v301, %v791
    %v793 = vlaneseq
    %v794 = vshrl.u32 %v793, 7
    %v795 = vsub.s32 6, %v794
    %v796 = vrot.slane %v301, %v795
    %v797 = vlaneseq
    %v798 = vshrl.u32 %v797, 7
    %v799 = vsub.s32 7, %v798
    %v800 = vrot.slane %v301, %v799
    %v801 = vlaneseq
    %v802 = vshrl.u32 %v801, 7
    %v803 = vsub.s32 0, %v802
    %v804 = vrot.slane %v304, %v803
    %v805 = vlaneseq
    %v806 = vshrl.u32 %v805, 7
    %v807 = vsub.s32 1, %v806
    %v808 = vrot.slane %v304, %v807
    %v809 = vlaneseq
    %v810 = vshrl.u32 %v809, 7
    %v811 = vsub.s32 2, %v810
    %v812 = vrot.slane %v304, %v811
    %v813 = vlaneseq
    %v814 = vshrl.u32 %v813, 7
    %v815 = vsub.s32 3, %v814
    %v816 = vrot.slane %v304, %v815
    %v817 = vlaneseq
    %v818 = vshrl.u32 %v817, 7
    %v819 = vsub.s32 4, %v818
    %v820 = vrot.slane %v304, %v819
    %v821 = vlaneseq
    %v822 = vshrl.u32 %v821, 7
    %v823 = vsub.s32 5, %v822
    %v824 = vrot.slane %v304, %v823
    %v825 = vlaneseq
    %v826 = vshrl.u32 %v825, 7
    %v827 = vsub.s32 6, %v826
    %v828 = vrot.slane %v304, %v827
    %v829 = vlaneseq
    %v830 = vshrl.u32 %v829, 7
    %v831 = vsub.s32 7, %v830
    %v832 = vrot.slane %v304, %v831
    %v833 = vcombine.low %v324, %v328
    %v834 = vcombine.low %v332, %v336
    %v835 = vcombine.low %v340, %v344
    %v836 = vcombine.low %v348, %v352
    %v838 = vunpack.c.l.s4 1966171168
    %v839 = vunpack.c.0.s8 %v838
    %v840 = vlaneseq
    %v841 = vshrl.u32 %v840, 7
    %v842 = vsub.s32 %v839, %v841
    %v843 = vrot.slane %v833, %v842
    %v845 = vunpack.c.l.s4 1966171168
    %v846 = vunpack.c.0.s8 %v845
    %v847 = vlaneseq
    %v848 = vshrl.u32 %v847, 7
    %v849 = vsub.s32 %v846, %v848
    %v850 = vrot.slane %v834, %v849
    %v852 = vunpack.c.l.s4 1966171168
    %v853 = vunpack.c.0.s8 %v852
    %v854 = vlaneseq
    %v855 = vshrl.u32 %v854, 7
    %v856 = vsub.s32 %v853, %v855
    %v857 = vrot.slane %v835, %v856
    %v859 = vunpack.c.l.s4 1966171168
    %v860 = vunpack.c.0.s8 %v859
    %v861 = vlaneseq
    %v862 = vshrl.u32 %v861, 7
    %v863 = vsub.s32 %v860, %v862
    %v864 = vrot.slane %v836, %v863
    %v865 = vcombine.low %v843, %v850
    %v866 = vcombine.low %v857, %v864
    %v868 = vunpack.c.l.s4 1966171168
    %v869 = vunpack.c.0.s8 %v868
    %v870 = vlaneseq
    %v871 = vshrl.u32 %v870, 7
    %v872 = vsub.s32 %v869, %v871
    %v873 = vrot.slane %v865, %v872
    %v875 = vunpack.c.l.s4 1966171168
    %v876 = vunpack.c.0.s8 %v875
    %v877 = vlaneseq
    %v878 = vshrl.u32 %v877, 7
    %v879 = vsub.s32 %v876, %v878
    %v880 = vrot.slane %v866, %v879
    %v881 = vcombine.low %v873, %v880
    %v882 = vcombine.low %v356, %v360
    %v883 = vcombine.low %v364, %v368
    %v884 = vcombine.low %v372, %v376
    %v885 = vcombine.low %v380, %v384
    %v887 = vunpack.c.l.s4 1966171168
    %v888 = vunpack.c.0.s8 %v887
    %v889 = vlaneseq
    %v890 = vshrl.u32 %v889, 7
    %v891 = vsub.s32 %v888, %v890
    %v892 = vrot.slane %v882, %v891
    %v894 = vunpack.c.l.s4 1966171168
    %v895 = vunpack.c.0.s8 %v894
    %v896 = vlaneseq
    %v897 = vshrl.u32 %v896, 7
    %v898 = vsub.s32 %v895, %v897
    %v899 = vrot.slane %v883, %v898
    %v901 = vunpack.c.l.s4 1966171168
    %v902 = vunpack.c.0.s8 %v901
    %v903 = vlaneseq
    %v904 = vshrl.u32 %v903, 7
    %v905 = vsub.s32 %v902, %v904
    %v906 = vrot.slane %v884, %v905
    %v908 = vunpack.c.l.s4 1966171168
    %v909 = vunpack.c.0.s8 %v908
    %v910 = vlaneseq
    %v911 = vshrl.u32 %v910, 7
    %v912 = vsub.s32 %v909, %v911
    %v913 = vrot.slane %v885, %v912
    %v914 = vcombine.low %v892, %v899
    %v915 = vcombine.low %v906, %v913
    %v917 = vunpack.c.l.s4 1966171168
    %v918 = vunpack.c.0.s8 %v917
    %v919 = vlaneseq
    %v920 = vshrl.u32 %v919, 7
    %v921 = vsub.s32 %v918, %v920
    %v922 = vrot.slane %v914, %v921
    %v924 = vunpack.c.l.s4 1966171168
    %v925 = vunpack.c.0.s8 %v924
    %v926 = vlaneseq
    %v927 = vshrl.u32 %v926, 7
    %v928 = vsub.s32 %v925, %v927
    %v929 = vrot.slane %v915, %v928
    %v930 = vcombine.low %v922, %v929
    %v931 = vcombine.low %v388, %v392
    %v932 = vcombine.low %v396, %v400
    %v933 = vcombine.low %v404, %v408
    %v934 = vcombine.low %v412, %v416
    %v936 = vunpack.c.l.s4 1966171168
    %v937 = vunpack.c.0.s8 %v936
    %v938 = vlaneseq
    %v939 = vshrl.u32 %v938, 7
    %v940 = vsub.s32 %v937, %v939
    %v941 = vrot.slane %v931, %v940
    %v943 = vunpack.c.l.s4 1966171168
    %v944 = vunpack.c.0.s8 %v943
    %v945 = vlaneseq
    %v946 = vshrl.u32 %v945, 7
    %v947 = vsub.s32 %v944, %v946
    %v948 = vrot.slane %v932, %v947
    %v950 = vunpack.c.l.s4 1966171168
    %v951 = vunpack.c.0.s8 %v950
    %v952 = vlaneseq
    %v953 = vshrl.u32 %v952, 7
    %v954 = vsub.s32 %v951, %v953
    %v955 = vrot.slane %v933, %v954
    %v957 = vunpack.c.l.s4 1966171168
    %v958 = vunpack.c.0.s8 %v957
    %v959 = vlaneseq
    %v960 = vshrl.u32 %v959, 7
    %v961 = vsub.s32 %v958, %v960
    %v962 = vrot.slane %v934, %v961
    %v963 = vcombine.low %v941, %v948
    %v964 = vcombine.low %v955, %v962
    %v966 = vunpack.c.l.s4 1966171168
    %v967 = vunpack.c.0.s8 %v966
    %v968 = vlaneseq
    %v969 = vshrl.u32 %v968, 7
    %v970 = vsub.s32 %v967, %v969
    %v971 = vrot.slane %v963, %v970
    %v973 = vunpack.c.l.s4 1966171168
    %v974 = vunpack.c.0.s8 %v973
    %v975 = vlaneseq
    %v976 = vshrl.u32 %v975, 7
    %v977 = vsub.s32 %v974, %v976
    %v978 = vrot.slane %v964, %v977
    %v979 = vcombine.low %v971, %v978
    %v980 = vcombine.low %v420, %v424
    %v981 = vcombine.low %v428, %v432
    %v982 = vcombine.low %v436, %v440
    %v983 = vcombine.low %v444, %v448
    %v985 = vunpack.c.l.s4 1966171168
    %v986 = vunpack.c.0.s8 %v985
    %v987 = vlaneseq
    %v988 = vshrl.u32 %v987, 7
    %v989 = vsub.s32 %v986, %v988
    %v990 = vrot.slane %v980, %v989
    %v992 = vunpack.c.l.s4 1966171168
    %v993 = vunpack.c.0.s8 %v992
    %v994 = vlaneseq
    %v995 = vshrl.u32 %v994, 7
    %v996 = vsub.s32 %v993, %v995
    %v997 = vrot.slane %v981, %v996
    %v999 = vunpack.c.l.s4 1966171168
    %v1000 = vunpack.c.0.s8 %v999
    %v1001 = vlaneseq
    %v1002 = vshrl.u32 %v1001, 7
    %v1003 = vsub.s32 %v1000, %v1002
    %v1004 = vrot.slane %v982, %v1003
    %v1006 = vunpack.c.l.s4 1966171168
    %v1007 = vunpack.c.0.s8 %v1006
    %v1008 = vlaneseq
    %v1009 = vshrl.u32 %v1008, 7
    %v1010 = vsub.s32 %v1007, %v1009
    %v1011 = vrot.slane %v983, %v1010
    %v1012 = vcombine.low %v990, %v997
    %v1013 = vcombine.low %v1004, %v1011
    %v1015 = vunpack.c.l.s4 1966171168
    %v1016 = vunpack.c.0.s8 %v1015
    %v1017 = vlaneseq
    %v1018 = vshrl.u32 %v1017, 7
    %v1019 = vsub.s32 %v1016, %v1018
    %v1020 = vrot.slane %v1012, %v1019
    %v1022 = vunpack.c.l.s4 1966171168
    %v1023 = vunpack.c.0.s8 %v1022
    %v1024 = vlaneseq
    %v1025 = vshrl.u32 %v1024, 7
    %v1026 = vsub.s32 %v1023, %v1025
    %v1027 = vrot.slane %v1013, %v1026
    %v1028 = vcombine.low %v1020, %v1027
    %v1029 = vcombine.low %v452, %v456
    %v1030 = vcombine.low %v460, %v464
    %v1031 = vcombine.low %v468, %v472
    %v1032 = vcombine.low %v476, %v480
    %v1034 = vunpack.c.l.s4 1966171168
    %v1035 = vunpack.c.0.s8 %v1034
    %v1036 = vlaneseq
    %v1037 = vshrl.u32 %v1036, 7
    %v1038 = vsub.s32 %v1035, %v1037
    %v1039 = vrot.slane %v1029, %v1038
    %v1041 = vunpack.c.l.s4 1966171168
    %v1042 = vunpack.c.0.s8 %v1041
    %v1043 = vlaneseq
    %v1044 = vshrl.u32 %v1043, 7
    %v1045 = vsub.s32 %v1042, %v1044
    %v1046 = vrot.slane %v1030, %v1045
    %v1048 = vunpack.c.l.s4 1966171168
    %v1049 = vunpack.c.0.s8 %v1048
    %v1050 = vlaneseq
    %v1051 = vshrl.u32 %v1050, 7
    %v1052 = vsub.s32 %v1049, %v1051
    %v1053 = vrot.slane %v1031, %v1052
    %v1055 = vunpack.c.l.s4 1966171168
    %v1056 = vunpack.c.0.s8 %v1055
    %v1057 = vlaneseq
    %v1058 = vshrl.u32 %v1057, 7
    %v1059 = vsub.s32 %v1056, %v1058
    %v1060 = vrot.slane %v1032, %v1059
    %v1061 = vcombine.low %v1039, %v1046
    %v1062 = vcombine.low %v1053, %v1060
    %v1064 = vunpack.c.l.s4 1966171168
    %v1065 = vunpack.c.0.s8 %v1064
    %v1066 = vlaneseq
    %v1067 = vshrl.u32 %v1066, 7
    %v1068 = vsub.s32 %v1065, %v1067
    %v1069 = vrot.slane %v1061, %v1068
    %v1071 = vunpack.c.l.s4 1966171168
    %v1072 = vunpack.c.0.s8 %v1071
    %v1073 = vlaneseq
    %v1074 = vshrl.u32 %v1073, 7
    %v1075 = vsub.s32 %v1072, %v1074
    %v1076 = vrot.slane %v1062, %v1075
    %v1077 = vcombine.low %v1069, %v1076
    %v1078 = vcombine.low %v484, %v488
    %v1079 = vcombine.low %v492, %v496
    %v1080 = vcombine.low %v500, %v504
    %v1081 = vcombine.low %v508, %v512
    %v1083 = vunpack.c.l.s4 1966171168
    %v1084 = vunpack.c.0.s8 %v1083
    %v1085 = vlaneseq
    %v1086 = vshrl.u32 %v1085, 7
    %v1087 = vsub.s32 %v1084, %v1086
    %v1088 = vrot.slane %v1078, %v1087
    %v1090 = vunpack.c.l.s4 1966171168
    %v1091 = vunpack.c.0.s8 %v1090
    %v1092 = vlaneseq
    %v1093 = vshrl.u32 %v1092, 7
    %v1094 = vsub.s32 %v1091, %v1093
    %v1095 = vrot.slane %v1079, %v1094
    %v1097 = vunpack.c.l.s4 1966171168
    %v1098 = vunpack.c.0.s8 %v1097
    %v1099 = vlaneseq
    %v1100 = vshrl.u32 %v1099, 7
    %v1101 = vsub.s32 %v1098, %v1100
    %v1102 = vrot.slane %v1080, %v1101
    %v1104 = vunpack.c.l.s4 1966171168
    %v1105 = vunpack.c.0.s8 %v1104
    %v1106 = vlaneseq
    %v1107 = vshrl.u32 %v1106, 7
    %v1108 = vsub.s32 %v1105, %v1107
    %v1109 = vrot.slane %v1081, %v1108
    %v1110 = vcombine.low %v1088, %v1095
    %v1111 = vcombine.low %v1102, %v1109
    %v1113 = vunpack.c.l.s4 1966171168
    %v1114 = vunpack.c.0.s8 %v1113
    %v1115 = vlaneseq
    %v1116 = vshrl.u32 %v1115, 7
    %v1117 = vsub.s32 %v1114, %v1116
    %v1118 = vrot.slane %v1110, %v1117
    %v1120 = vunpack.c.l.s4 1966171168
    %v1121 = vunpack.c.0.s8 %v1120
    %v1122 = vlaneseq
    %v1123 = vshrl.u32 %v1122, 7
    %v1124 = vsub.s32 %v1121, %v1123
    %v1125 = vrot.slane %v1111, %v1124
    %v1126 = vcombine.low %v1118, %v1125
    %v1127 = vcombine.low %v516, %v520
    %v1128 = vcombine.low %v524, %v528
    %v1129 = vcombine.low %v532, %v536
    %v1130 = vcombine.low %v540, %v544
    %v1132 = vunpack.c.l.s4 1966171168
    %v1133 = vunpack.c.0.s8 %v1132
    %v1134 = vlaneseq
    %v1135 = vshrl.u32 %v1134, 7
    %v1136 = vsub.s32 %v1133, %v1135
    %v1137 = vrot.slane %v1127, %v1136
    %v1139 = vunpack.c.l.s4 1966171168
    %v1140 = vunpack.c.0.s8 %v1139
    %v1141 = vlaneseq
    %v1142 = vshrl.u32 %v1141, 7
    %v1143 = vsub.s32 %v1140, %v1142
    %v1144 = vrot.slane %v1128, %v1143
    %v1146 = vunpack.c.l.s4 1966171168
    %v1147 = vunpack.c.0.s8 %v1146
    %v1148 = vlaneseq
    %v1149 = vshrl.u32 %v1148, 7
    %v1150 = vsub.s32 %v1147, %v1149
    %v1151 = vrot.slane %v1129, %v1150
    %v1153 = vunpack.c.l.s4 1966171168
    %v1154 = vunpack.c.0.s8 %v1153
    %v1155 = vlaneseq
    %v1156 = vshrl.u32 %v1155, 7
    %v1157 = vsub.s32 %v1154, %v1156
    %v1158 = vrot.slane %v1130, %v1157
    %v1159 = vcombine.low %v1137, %v1144
    %v1160 = vcombine.low %v1151, %v1158
    %v1162 = vunpack.c.l.s4 1966171168
    %v1163 = vunpack.c.0.s8 %v1162
    %v1164 = vlaneseq
    %v1165 = vshrl.u32 %v1164, 7
    %v1166 = vsub.s32 %v1163, %v1165
    %v1167 = vrot.slane %v1159, %v1166
    %v1169 = vunpack.c.l.s4 1966171168
    %v1170 = vunpack.c.0.s8 %v1169
    %v1171 = vlaneseq
    %v1172 = vshrl.u32 %v1171, 7
    %v1173 = vsub.s32 %v1170, %v1172
    %v1174 = vrot.slane %v1160, %v1173
    %v1175 = vcombine.low %v1167, %v1174
    %v1176 = vcombine.low %v548, %v552
    %v1177 = vcombine.low %v556, %v560
    %v1178 = vcombine.low %v564, %v568
    %v1179 = vcombine.low %v572, %v576
    %v1181 = vunpack.c.l.s4 1966171168
    %v1182 = vunpack.c.0.s8 %v1181
    %v1183 = vlaneseq
    %v1184 = vshrl.u32 %v1183, 7
    %v1185 = vsub.s32 %v1182, %v1184
    %v1186 = vrot.slane %v1176, %v1185
    %v1188 = vunpack.c.l.s4 1966171168
    %v1189 = vunpack.c.0.s8 %v1188
    %v1190 = vlaneseq
    %v1191 = vshrl.u32 %v1190, 7
    %v1192 = vsub.s32 %v1189, %v1191
    %v1193 = vrot.slane %v1177, %v1192
    %v1195 = vunpack.c.l.s4 1966171168
    %v1196 = vunpack.c.0.s8 %v1195
    %v1197 = vlaneseq
    %v1198 = vshrl.u32 %v1197, 7
    %v1199 = vsub.s32 %v1196, %v1198
    %v1200 = vrot.slane %v1178, %v1199
    %v1202 = vunpack.c.l.s4 1966171168
    %v1203 = vunpack.c.0.s8 %v1202
    %v1204 = vlaneseq
    %v1205 = vshrl.u32 %v1204, 7
    %v1206 = vsub.s32 %v1203, %v1205
    %v1207 = vrot.slane %v1179, %v1206
    %v1208 = vcombine.low %v1186, %v1193
    %v1209 = vcombine.low %v1200, %v1207
    %v1211 = vunpack.c.l.s4 1966171168
    %v1212 = vunpack.c.0.s8 %v1211
    %v1213 = vlaneseq
    %v1214 = vshrl.u32 %v1213, 7
    %v1215 = vsub.s32 %v1212, %v1214
    %v1216 = vrot.slane %v1208, %v1215
    %v1218 = vunpack.c.l.s4 1966171168
    %v1219 = vunpack.c.0.s8 %v1218
    %v1220 = vlaneseq
    %v1221 = vshrl.u32 %v1220, 7
    %v1222 = vsub.s32 %v1219, %v1221
    %v1223 = vrot.slane %v1209, %v1222
    %v1224 = vcombine.low %v1216, %v1223
    %v1225 = vcombine.low %v580, %v584
    %v1226 = vcombine.low %v588, %v592
    %v1227 = vcombine.low %v596, %v600
    %v1228 = vcombine.low %v604, %v608
    %v1230 = vunpack.c.l.s4 1966171168
    %v1231 = vunpack.c.0.s8 %v1230
    %v1232 = vlaneseq
    %v1233 = vshrl.u32 %v1232, 7
    %v1234 = vsub.s32 %v1231, %v1233
    %v1235 = vrot.slane %v1225, %v1234
    %v1237 = vunpack.c.l.s4 1966171168
    %v1238 = vunpack.c.0.s8 %v1237
    %v1239 = vlaneseq
    %v1240 = vshrl.u32 %v1239, 7
    %v1241 = vsub.s32 %v1238, %v1240
    %v1242 = vrot.slane %v1226, %v1241
    %v1244 = vunpack.c.l.s4 1966171168
    %v1245 = vunpack.c.0.s8 %v1244
    %v1246 = vlaneseq
    %v1247 = vshrl.u32 %v1246, 7
    %v1248 = vsub.s32 %v1245, %v1247
    %v1249 = vrot.slane %v1227, %v1248
    %v1251 = vunpack.c.l.s4 1966171168
    %v1252 = vunpack.c.0.s8 %v1251
    %v1253 = vlaneseq
    %v1254 = vshrl.u32 %v1253, 7
    %v1255 = vsub.s32 %v1252, %v1254
    %v1256 = vrot.slane %v1228, %v1255
    %v1257 = vcombine.low %v1235, %v1242
    %v1258 = vcombine.low %v1249, %v1256
    %v1260 = vunpack.c.l.s4 1966171168
    %v1261 = vunpack.c.0.s8 %v1260
    %v1262 = vlaneseq
    %v1263 = vshrl.u32 %v1262, 7
    %v1264 = vsub.s32 %v1261, %v1263
    %v1265 = vrot.slane %v1257, %v1264
    %v1267 = vunpack.c.l.s4 1966171168
    %v1268 = vunpack.c.0.s8 %v1267
    %v1269 = vlaneseq
    %v1270 = vshrl.u32 %v1269, 7
    %v1271 = vsub.s32 %v1268, %v1270
    %v1272 = vrot.slane %v1258, %v1271
    %v1273 = vcombine.low %v1265, %v1272
    %v1274 = vcombine.low %v612, %v616
    %v1275 = vcombine.low %v620, %v624
    %v1276 = vcombine.low %v628, %v632
    %v1277 = vcombine.low %v636, %v640
    %v1279 = vunpack.c.l.s4 1966171168
    %v1280 = vunpack.c.0.s8 %v1279
    %v1281 = vlaneseq
    %v1282 = vshrl.u32 %v1281, 7
    %v1283 = vsub.s32 %v1280, %v1282
    %v1284 = vrot.slane %v1274, %v1283
    %v1286 = vunpack.c.l.s4 1966171168
    %v1287 = vunpack.c.0.s8 %v1286
    %v1288 = vlaneseq
    %v1289 = vshrl.u32 %v1288, 7
    %v1290 = vsub.s32 %v1287, %v1289
    %v1291 = vrot.slane %v1275, %v1290
    %v1293 = vunpack.c.l.s4 1966171168
    %v1294 = vunpack.c.0.s8 %v1293
    %v1295 = vlaneseq
    %v1296 = vshrl.u32 %v1295, 7
    %v1297 = vsub.s32 %v1294, %v1296
    %v1298 = vrot.slane %v1276, %v1297
    %v1300 = vunpack.c.l.s4 1966171168
    %v1301 = vunpack.c.0.s8 %v1300
    %v1302 = vlaneseq
    %v1303 = vshrl.u32 %v1302, 7
    %v1304 = vsub.s32 %v1301, %v1303
    %v1305 = vrot.slane %v1277, %v1304
    %v1306 = vcombine.low %v1284, %v1291
    %v1307 = vcombine.low %v1298, %v1305
    %v1309 = vunpack.c.l.s4 1966171168
    %v1310 = vunpack.c.0.s8 %v1309
    %v1311 = vlaneseq
    %v1312 = vshrl.u32 %v1311, 7
    %v1313 = vsub.s32 %v1310, %v1312
    %v1314 = vrot.slane %v1306, %v1313
    %v1316 = vunpack.c.l.s4 1966171168
    %v1317 = vunpack.c.0.s8 %v1316
    %v1318 = vlaneseq
    %v1319 = vshrl.u32 %v1318, 7
    %v1320 = vsub.s32 %v1317, %v1319
    %v1321 = vrot.slane %v1307, %v1320
    %v1322 = vcombine.low %v1314, %v1321
    %v1323 = vcombine.low %v644, %v648
    %v1324 = vcombine.low %v652, %v656
    %v1325 = vcombine.low %v660, %v664
    %v1326 = vcombine.low %v668, %v672
    %v1328 = vunpack.c.l.s4 1966171168
    %v1329 = vunpack.c.0.s8 %v1328
    %v1330 = vlaneseq
    %v1331 = vshrl.u32 %v1330, 7
    %v1332 = vsub.s32 %v1329, %v1331
    %v1333 = vrot.slane %v1323, %v1332
    %v1335 = vunpack.c.l.s4 1966171168
    %v1336 = vunpack.c.0.s8 %v1335
    %v1337 = vlaneseq
    %v1338 = vshrl.u32 %v1337, 7
    %v1339 = vsub.s32 %v1336, %v1338
    %v1340 = vrot.slane %v1324, %v1339
    %v1342 = vunpack.c.l.s4 1966171168
    %v1343 = vunpack.c.0.s8 %v1342
    %v1344 = vlaneseq
    %v1345 = vshrl.u32 %v1344, 7
    %v1346 = vsub.s32 %v1343, %v1345
    %v1347 = vrot.slane %v1325, %v1346
    %v1349 = vunpack.c.l.s4 1966171168
    %v1350 = vunpack.c.0.s8 %v1349
    %v1351 = vlaneseq
    %v1352 = vshrl.u32 %v1351, 7
    %v1353 = vsub.s32 %v1350, %v1352
    %v1354 = vrot.slane %v1326, %v1353
    %v1355 = vcombine.low %v1333, %v1340
    %v1356 = vcombine.low %v1347, %v1354
    %v1358 = vunpack.c.l.s4 1966171168
    %v1359 = vunpack.c.0.s8 %v1358
    %v1360 = vlaneseq
    %v1361 = vshrl.u32 %v1360, 7
    %v1362 = vsub.s32 %v1359, %v1361
    %v1363 = vrot.slane %v1355, %v1362
    %v1365 = vunpack.c.l.s4 1966171168
    %v1366 = vunpack.c.0.s8 %v1365
    %v1367 = vlaneseq
    %v1368 = vshrl.u32 %v1367, 7
    %v1369 = vsub.s32 %v1366, %v1368
    %v1370 = vrot.slane %v1356, %v1369
    %v1371 = vcombine.low %v1363, %v1370
    %v1372 = vcombine.low %v676, %v680
    %v1373 = vcombine.low %v684, %v688
    %v1374 = vcombine.low %v692, %v696
    %v1375 = vcombine.low %v700, %v704
    %v1377 = vunpack.c.l.s4 1966171168
    %v1378 = vunpack.c.0.s8 %v1377
    %v1379 = vlaneseq
    %v1380 = vshrl.u32 %v1379, 7
    %v1381 = vsub.s32 %v1378, %v1380
    %v1382 = vrot.slane %v1372, %v1381
    %v1384 = vunpack.c.l.s4 1966171168
    %v1385 = vunpack.c.0.s8 %v1384
    %v1386 = vlaneseq
    %v1387 = vshrl.u32 %v1386, 7
    %v1388 = vsub.s32 %v1385, %v1387
    %v1389 = vrot.slane %v1373, %v1388
    %v1391 = vunpack.c.l.s4 1966171168
    %v1392 = vunpack.c.0.s8 %v1391
    %v1393 = vlaneseq
    %v1394 = vshrl.u32 %v1393, 7
    %v1395 = vsub.s32 %v1392, %v1394
    %v1396 = vrot.slane %v1374, %v1395
    %v1398 = vunpack.c.l.s4 1966171168
    %v1399 = vunpack.c.0.s8 %v1398
    %v1400 = vlaneseq
    %v1401 = vshrl.u32 %v1400, 7
    %v1402 = vsub.s32 %v1399, %v1401
    %v1403 = vrot.slane %v1375, %v1402
    %v1404 = vcombine.low %v1382, %v1389
    %v1405 = vcombine.low %v1396, %v1403
    %v1407 = vunpack.c.l.s4 1966171168
    %v1408 = vunpack.c.0.s8 %v1407
    %v1409 = vlaneseq
    %v1410 = vshrl.u32 %v1409, 7
    %v1411 = vsub.s32 %v1408, %v1410
    %v1412 = vrot.slane %v1404, %v1411
    %v1414 = vunpack.c.l.s4 1966171168
    %v1415 = vunpack.c.0.s8 %v1414
    %v1416 = vlaneseq
    %v1417 = vshrl.u32 %v1416, 7
    %v1418 = vsub.s32 %v1415, %v1417
    %v1419 = vrot.slane %v1405, %v1418
    %v1420 = vcombine.low %v1412, %v1419
    %v1421 = vcombine.low %v708, %v712
    %v1422 = vcombine.low %v716, %v720
    %v1423 = vcombine.low %v724, %v728
    %v1424 = vcombine.low %v732, %v736
    %v1426 = vunpack.c.l.s4 1966171168
    %v1427 = vunpack.c.0.s8 %v1426
    %v1428 = vlaneseq
    %v1429 = vshrl.u32 %v1428, 7
    %v1430 = vsub.s32 %v1427, %v1429
    %v1431 = vrot.slane %v1421, %v1430
    %v1433 = vunpack.c.l.s4 1966171168
    %v1434 = vunpack.c.0.s8 %v1433
    %v1435 = vlaneseq
    %v1436 = vshrl.u32 %v1435, 7
    %v1437 = vsub.s32 %v1434, %v1436
    %v1438 = vrot.slane %v1422, %v1437
    %v1440 = vunpack.c.l.s4 1966171168
    %v1441 = vunpack.c.0.s8 %v1440
    %v1442 = vlaneseq
    %v1443 = vshrl.u32 %v1442, 7
    %v1444 = vsub.s32 %v1441, %v1443
    %v1445 = vrot.slane %v1423, %v1444
    %v1447 = vunpack.c.l.s4 1966171168
    %v1448 = vunpack.c.0.s8 %v1447
    %v1449 = vlaneseq
    %v1450 = vshrl.u32 %v1449, 7
    %v1451 = vsub.s32 %v1448, %v1450
    %v1452 = vrot.slane %v1424, %v1451
    %v1453 = vcombine.low %v1431, %v1438
    %v1454 = vcombine.low %v1445, %v1452
    %v1456 = vunpack.c.l.s4 1966171168
    %v1457 = vunpack.c.0.s8 %v1456
    %v1458 = vlaneseq
    %v1459 = vshrl.u32 %v1458, 7
    %v1460 = vsub.s32 %v1457, %v1459
    %v1461 = vrot.slane %v1453, %v1460
    %v1463 = vunpack.c.l.s4 1966171168
    %v1464 = vunpack.c.0.s8 %v1463
    %v1465 = vlaneseq
    %v1466 = vshrl.u32 %v1465, 7
    %v1467 = vsub.s32 %v1464, %v1466
    %v1468 = vrot.slane %v1454, %v1467
    %v1469 = vcombine.low %v1461, %v1468
    %v1470 = vcombine.low %v740, %v744
    %v1471 = vcombine.low %v748, %v752
    %v1472 = vcombine.low %v756, %v760
    %v1473 = vcombine.low %v764, %v768
    %v1475 = vunpack.c.l.s4 1966171168
    %v1476 = vunpack.c.0.s8 %v1475
    %v1477 = vlaneseq
    %v1478 = vshrl.u32 %v1477, 7
    %v1479 = vsub.s32 %v1476, %v1478
    %v1480 = vrot.slane %v1470, %v1479
    %v1482 = vunpack.c.l.s4 1966171168
    %v1483 = vunpack.c.0.s8 %v1482
    %v1484 = vlaneseq
    %v1485 = vshrl.u32 %v1484, 7
    %v1486 = vsub.s32 %v1483, %v1485
    %v1487 = vrot.slane %v1471, %v1486
    %v1489 = vunpack.c.l.s4 1966171168
    %v1490 = vunpack.c.0.s8 %v1489
    %v1491 = vlaneseq
    %v1492 = vshrl.u32 %v1491, 7
    %v1493 = vsub.s32 %v1490, %v1492
    %v1494 = vrot.slane %v1472, %v1493
    %v1496 = vunpack.c.l.s4 1966171168
    %v1497 = vunpack.c.0.s8 %v1496
    %v1498 = vlaneseq
    %v1499 = vshrl.u32 %v1498, 7
    %v1500 = vsub.s32 %v1497, %v1499
    %v1501 = vrot.slane %v1473, %v1500
    %v1502 = vcombine.low %v1480, %v1487
    %v1503 = vcombine.low %v1494, %v1501
    %v1505 = vunpack.c.l.s4 1966171168
    %v1506 = vunpack.c.0.s8 %v1505
    %v1507 = vlaneseq
    %v1508 = vshrl.u32 %v1507, 7
    %v1509 = vsub.s32 %v1506, %v1508
    %v1510 = vrot.slane %v1502, %v1509
    %v1512 = vunpack.c.l.s4 1966171168
    %v1513 = vunpack.c.0.s8 %v1512
    %v1514 = vlaneseq
    %v1515 = vshrl.u32 %v1514, 7
    %v1516 = vsub.s32 %v1513, %v1515
    %v1517 = vrot.slane %v1503, %v1516
    %v1518 = vcombine.low %v1510, %v1517
    %v1519 = vcombine.low %v772, %v776
    %v1520 = vcombine.low %v780, %v784
    %v1521 = vcombine.low %v788, %v792
    %v1522 = vcombine.low %v796, %v800
    %v1524 = vunpack.c.l.s4 1966171168
    %v1525 = vunpack.c.0.s8 %v1524
    %v1526 = vlaneseq
    %v1527 = vshrl.u32 %v1526, 7
    %v1528 = vsub.s32 %v1525, %v1527
    %v1529 = vrot.slane %v1519, %v1528
    %v1531 = vunpack.c.l.s4 1966171168
    %v1532 = vunpack.c.0.s8 %v1531
    %v1533 = vlaneseq
    %v1534 = vshrl.u32 %v1533, 7
    %v1535 = vsub.s32 %v1532, %v1534
    %v1536 = vrot.slane %v1520, %v1535
    %v1538 = vunpack.c.l.s4 1966171168
    %v1539 = vunpack.c.0.s8 %v1538
    %v1540 = vlaneseq
    %v1541 = vshrl.u32 %v1540, 7
    %v1542 = vsub.s32 %v1539, %v1541
    %v1543 = vrot.slane %v1521, %v1542
    %v1545 = vunpack.c.l.s4 1966171168
    %v1546 = vunpack.c.0.s8 %v1545
    %v1547 = vlaneseq
    %v1548 = vshrl.u32 %v1547, 7
    %v1549 = vsub.s32 %v1546, %v1548
    %v1550 = vrot.slane %v1522, %v1549
    %v1551 = vcombine.low %v1529, %v1536
    %v1552 = vcombine.low %v1543, %v1550
    %v1554 = vunpack.c.l.s4 1966171168
    %v1555 = vunpack.c.0.s8 %v1554
    %v1556 = vlaneseq
    %v1557 = vshrl.u32 %v1556, 7
    %v1558 = vsub.s32 %v1555, %v1557
    %v1559 = vrot.slane %v1551, %v1558
    %v1561 = vunpack.c.l.s4 1966171168
    %v1562 = vunpack.c.0.s8 %v1561
    %v1563 = vlaneseq
    %v1564 = vshrl.u32 %v1563, 7
    %v1565 = vsub.s32 %v1562, %v1564
    %v1566 = vrot.slane %v1552, %v1565
    %v1567 = vcombine.low %v1559, %v1566
    %v1568 = vcombine.low %v804, %v808
    %v1569 = vcombine.low %v812, %v816
    %v1570 = vcombine.low %v820, %v824
    %v1571 = vcombine.low %v828, %v832
    %v1573 = vunpack.c.l.s4 1966171168
    %v1574 = vunpack.c.0.s8 %v1573
    %v1575 = vlaneseq
    %v1576 = vshrl.u32 %v1575, 7
    %v1577 = vsub.s32 %v1574, %v1576
    %v1578 = vrot.slane %v1568, %v1577
    %v1580 = vunpack.c.l.s4 1966171168
    %v1581 = vunpack.c.0.s8 %v1580
    %v1582 = vlaneseq
    %v1583 = vshrl.u32 %v1582, 7
    %v1584 = vsub.s32 %v1581, %v1583
    %v1585 = vrot.slane %v1569, %v1584
    %v1587 = vunpack.c.l.s4 1966171168
    %v1588 = vunpack.c.0.s8 %v1587
    %v1589 = vlaneseq
    %v1590 = vshrl.u32 %v1589, 7
    %v1591 = vsub.s32 %v1588, %v1590
    %v1592 = vrot.slane %v1570, %v1591
    %v1594 = vunpack.c.l.s4 1966171168
    %v1595 = vunpack.c.0.s8 %v1594
    %v1596 = vlaneseq
    %v1597 = vshrl.u32 %v1596, 7
    %v1598 = vsub.s32 %v1595, %v1597
    %v1599 = vrot.slane %v1571, %v1598
    %v1600 = vcombine.low %v1578, %v1585
    %v1601 = vcombine.low %v1592, %v1599
    %v1603 = vunpack.c.l.s4 1966171168
    %v1604 = vunpack.c.0.s8 %v1603
    %v1605 = vlaneseq
    %v1606 = vshrl.u32 %v1605, 7
    %v1607 = vsub.s32 %v1604, %v1606
    %v1608 = vrot.slane %v1600, %v1607
    %v1610 = vunpack.c.l.s4 1966171168
    %v1611 = vunpack.c.0.s8 %v1610
    %v1612 = vlaneseq
    %v1613 = vshrl.u32 %v1612, 7
    %v1614 = vsub.s32 %v1611, %v1613
    %v1615 = vrot.slane %v1601, %v1614
    %v1616 = vcombine.low %v1608, %v1615
    %1617 = vset.pattern.permute.xlu0 0
    %1618 = vperm.xlu0 %1617, %v881
    %v1619 = vpop.permute.xlu0 %1618
    %1620 = vset.pattern.permute.xlu0 0
    %1621 = vperm.xlu0 %1620, %v930
    %v1622 = vpop.permute.xlu0 %1621
    %1623 = vset.pattern.permute.xlu0 0
    %1624 = vperm.xlu0 %1623, %v979
    %v1625 = vpop.permute.xlu0 %1624
    %1626 = vset.pattern.permute.xlu0 0
    %1627 = vperm.xlu0 %1626, %v1028
    %v1628 = vpop.permute.xlu0 %1627
    %1629 = vset.pattern.permute.xlu0 0
    %1630 = vperm.xlu0 %1629, %v1077
    %v1631 = vpop.permute.xlu0 %1630
    %1632 = vset.pattern.permute.xlu0 0
    %1633 = vperm.xlu0 %1632, %v1126
    %v1634 = vpop.permute.xlu0 %1633
    %1635 = vset.pattern.permute.xlu0 0
    %1636 = vperm.xlu0 %1635, %v1175
    %v1637 = vpop.permute.xlu0 %1636
    %1638 = vset.pattern.permute.xlu0 0
    %1639 = vperm.xlu0 %1638, %v1224
    %v1640 = vpop.permute.xlu0 %1639
    %1641 = vset.pattern.permute.xlu0 0
    %1642 = vperm.xlu0 %1641, %v1273
    %v1643 = vpop.permute.xlu0 %1642
    %1644 = vset.pattern.permute.xlu0 0
    %1645 = vperm.xlu0 %1644, %v1322
    %v1646 = vpop.permute.xlu0 %1645
    %1647 = vset.pattern.permute.xlu0 0
    %1648 = vperm.xlu0 %1647, %v1371
    %v1649 = vpop.permute.xlu0 %1648
    %1650 = vset.pattern.permute.xlu0 0
    %1651 = vperm.xlu0 %1650, %v1420
    %v1652 = vpop.permute.xlu0 %1651
    %1653 = vset.pattern.permute.xlu0 0
    %1654 = vperm.xlu0 %1653, %v1469
    %v1655 = vpop.permute.xlu0 %1654
    %1656 = vset.pattern.permute.xlu0 0
    %1657 = vperm.xlu0 %1656, %v1518
    %v1658 = vpop.permute.xlu0 %1657
    %1659 = vset.pattern.permute.xlu0 0
    %1660 = vperm.xlu0 %1659, %v1567
    %v1661 = vpop.permute.xlu0 %1660
    %1662 = vset.pattern.permute.xlu0 0
    %1663 = vperm.xlu0 %1662, %v1616
    %v1664 = vpop.permute.xlu0 %1663
    %v1665 = vlaneseq
    %v1666 = vand.u32 %v1665, 127
    %v1667 = vlaneseq
    %v1668 = vshrl.u32 %v1667, 7
    %v1669 = vsub.s32 %v1666, %v1668
    %v1670 = vrot.slane %v1619, %v1669
    %v1671 = vadd.s32 %v1666, 4294967288
    %v1672 = vlaneseq
    %v1673 = vshrl.u32 %v1672, 7
    %v1674 = vsub.s32 %v1671, %v1673
    %v1675 = vrot.slane %v1622, %v1674
    %vm1676 = vcmask 130112
    %v1677 = vsel %vm1676, %v1675, %v1670
    %v1678 = vadd.s32 %v1666, 4294967280
    %v1679 = vlaneseq
    %v1680 = vshrl.u32 %v1679, 7
    %v1681 = vsub.s32 %v1678, %v1680
    %v1682 = vrot.slane %v1625, %v1681
    %vm1683 = vcmask 195712
    %v1684 = vsel %vm1683, %v1682, %v1677
    %v1685 = vadd.s32 %v1666, 4294967272
    %v1686 = vlaneseq
    %v1687 = vshrl.u32 %v1686, 7
    %v1688 = vsub.s32 %v1685, %v1687
    %v1689 = vrot.slane %v1628, %v1688
    %vm1690 = vcmask 261312
    %v1691 = vsel %vm1690, %v1689, %v1684
    %v1692 = vadd.s32 %v1666, 4294967264
    %v1693 = vlaneseq
    %v1694 = vshrl.u32 %v1693, 7
    %v1695 = vsub.s32 %v1692, %v1694
    %v1696 = vrot.slane %v1631, %v1695
    %vm1697 = vcmask 326912
    %v1698 = vsel %vm1697, %v1696, %v1691
    %v1699 = vadd.s32 %v1666, 4294967256
    %v1700 = vlaneseq
    %v1701 = vshrl.u32 %v1700, 7
    %v1702 = vsub.s32 %v1699, %v1701
    %v1703 = vrot.slane %v1634, %v1702
    %vm1704 = vcmask 392512
    %v1705 = vsel %vm1704, %v1703, %v1698
    %v1706 = vadd.s32 %v1666, 4294967248
    %v1707 = vlaneseq
    %v1708 = vshrl.u32 %v1707, 7
    %v1709 = vsub.s32 %v1706, %v1708
    %v1710 = vrot.slane %v1637, %v1709
    %vm1711 = vcmask 458112
    %v1712 = vsel %vm1711, %v1710, %v1705
    %v1713 = vadd.s32 %v1666, 4294967240
    %v1714 = vlaneseq
    %v1715 = vshrl.u32 %v1714, 7
    %v1716 = vsub.s32 %v1713, %v1715
    %v1717 = vrot.slane %v1640, %v1716
    %vm1718 = vcmask 523712
    %v1719 = vsel %vm1718, %v1717, %v1712
    %v1720 = vadd.s32 %v1666, 4294967232
    %v1721 = vlaneseq
    %v1722 = vshrl.u32 %v1721, 7
    %v1723 = vsub.s32 %v1720, %v1722
    %v1724 = vrot.slane %v1643, %v1723
    %vm1725 = vcmask 589312
    %v1726 = vsel %vm1725, %v1724, %v1719
    %v1727 = vadd.s32 %v1666, 4294967224
    %v1728 = vlaneseq
    %v1729 = vshrl.u32 %v1728, 7
    %v1730 = vsub.s32 %v1727, %v1729
    %v1731 = vrot.slane %v1646, %v1730
    %vm1732 = vcmask 654912
    %v1733 = vsel %vm1732, %v1731, %v1726
    %v1734 = vadd.s32 %v1666, 4294967216
    %v1735 = vlaneseq
    %v1736 = vshrl.u32 %v1735, 7
    %v1737 = vsub.s32 %v1734, %v1736
    %v1738 = vrot.slane %v1649, %v1737
    %vm1739 = vcmask 720512
    %v1740 = vsel %vm1739, %v1738, %v1733
    %v1741 = vadd.s32 %v1666, 4294967208
    %v1742 = vlaneseq
    %v1743 = vshrl.u32 %v1742, 7
    %v1744 = vsub.s32 %v1741, %v1743
    %v1745 = vrot.slane %v1652, %v1744
    %vm1746 = vcmask 786112
    %v1747 = vsel %vm1746, %v1745, %v1740
    %v1748 = vadd.s32 %v1666, 4294967200
    %v1749 = vlaneseq
    %v1750 = vshrl.u32 %v1749, 7
    %v1751 = vsub.s32 %v1748, %v1750
    %v1752 = vrot.slane %v1655, %v1751
    %vm1753 = vcmask 851712
    %v1754 = vsel %vm1753, %v1752, %v1747
    %v1755 = vadd.s32 %v1666, 4294967192
    %v1756 = vlaneseq
    %v1757 = vshrl.u32 %v1756, 7
    %v1758 = vsub.s32 %v1755, %v1757
    %v1759 = vrot.slane %v1658, %v1758
    %vm1760 = vcmask 917312
    %v1761 = vsel %vm1760, %v1759, %v1754
    %v1762 = vadd.s32 %v1666, 4294967184
    %v1763 = vlaneseq
    %v1764 = vshrl.u32 %v1763, 7
    %v1765 = vsub.s32 %v1762, %v1764
    %v1766 = vrot.slane %v1661, %v1765
    %vm1767 = vcmask 982912
    %v1768 = vsel %vm1767, %v1766, %v1761
    %v1769 = vadd.s32 %v1666, 4294967176
    %v1770 = vlaneseq
    %v1771 = vshrl.u32 %v1770, 7
    %v1772 = vsub.s32 %v1769, %v1771
    %v1773 = vrot.slane %v1664, %v1772
    %vm1774 = vcmask 1048512
    %v1775 = vsel %vm1774, %v1773, %v1768
    %v1777 = vunpack.c.l.s4 1966171168
    %v1778 = vunpack.c.0.s8 %v1777
    %v1779 = vlaneseq
    %v1780 = vshrl.u32 %v1779, 7
    %v1781 = vsub.s32 %v1778, %v1780
    %v1782 = vrot.slane %v1775, %v1781
    %v1784 = vunpack.c.l.s4 1966171168
    %v1785 = vunpack.c.0.s8 %v1784
    %v1786 = vlaneseq
    %v1787 = vshrl.u32 %v1786, 7
    %v1788 = vsub.s32 %v1785, %v1787
    %v1789 = vrot.slane %v1782, %v1788
    %v1791 = vadd.f32 %v256, %v1789
    %1792 = vst [vmem:[#allocation2] sm:$0x1] %v1791
    // Predicated region
    $region14: #{tpu_custom_call.1} parent=1 // pred_check
      %p1793 = pneg %p25
    $region15: #{tpu_custom_call.1} parent=1 // pred_check_branch
      %1795 = sbr.rel (%p1793) target = $region17
    $region16: #{tpu_custom_call.1} parent=1 // pred_region
      %v1796 = vld [vmem:[#allocation2] sm:$0x1]
      %v1797 = vmul.f32 %v1796, 0.00390625
      %s1798 = sld [smem:[#allocation4]]
      %v1799 = vstv %s1798
      %v1800 = vrcp.pop %v1799
      %s1801 = vtos %v1800
      %v1802 = vlog2.pop %v1797
      %v1803 = vmul.f32 %v1802, 0.6931472
      %v1804 = vstv %s1801
      %v1805 = vmul.f32 %v1803, %v1804
      %v1806 = vmul.f32 %v1805, 1.442695
      %v1807 = vpow.pop %v1806
      %1808 = vst [vmem:[#allocation8] sm:$0x1] %v1807
    $region17: #{tpu_custom_call.1} parent=1 // pred_fallthru
      _
    // Predicated region
    $region18: #{tpu_custom_call.1} parent=1 // pred_check
      _
    $region19: #{tpu_custom_call.1} parent=1 // pred_check_branch
      %1810 = sbr.rel (0) target = $region21
    $region20: #{tpu_custom_call.1} parent=1 // pred_region
      %s1812 = ssub.s32 16, 16
      %1813 = vsyncadd [#allocation7], %s1812
      %s1815 = sshll.u32 [#allocation8], 4
      %s1816 = int_to_ptr.vmem [resolvable:$true] %s1815
      %1818 = dma.vmem_to_hbm [thread:$0]  %s1816, 16, %s2, [#allocation7]
    $region21: #{tpu_custom_call.1} parent=1 // pred_fallthru
      _
    // Predicated region
    $region22: #{tpu_custom_call.1} parent=1 // pred_check
      _
    $region23: #{tpu_custom_call.1} parent=1 // pred_check_branch
      %1820 = sbr.rel (0) target = $region25
    $region24: #{tpu_custom_call.1} parent=1 // pred_region
      %1821 = dma.done [#allocation7], 16
    $region25: #{tpu_custom_call.1} parent=1 // pred_fallthru
      _
    %1822 = vsyncpa [#allocation6], 1
    %1823 = vsyncpa [#allocation7], 1

</llo_original>
